<compile_context>
chip_gen: v5e
topology: v5e:2x2
jax: 0.10.0
libtpu: 0.0.40
codegen_flags: <defaults>
</compile_context>

<pallas_src>
import jax
import jax.numpy as jnp
from jax.experimental import pallas as pl
from jax.experimental.pallas import tpu as pltpu

# Model dimensions (audio-window autoencoder config).
D = 256     # input feature dim (flattened track window; lane axis)
H = 128     # encoder/decoder hidden dim
L = 32      # latent dim (module semantics)
LP = 128    # latent dim zero-padded to a full 128-lane register inside the kernel

TILE_CAP = 1024   # max rows per grid step


def _round_up(n, m):
    return (n + m - 1) // m * m


def _cdiv(a, b):
    return -(-a // b)


def _num_tensorcores_per_chip():
    """Best-effort TensorCore-per-chip count (v7x has 2, v5e/v6e have 1)."""
    try:
        kind = jax.devices()[0].device_kind.lower()
        if "7" in kind:
            return 2
    except Exception:
        pass
    return 1


def _choose_tiling(batch, n_cores):
    """Pick (padded_batch, tile_rows, n_tiles) based on the chip generation."""
    bp = _round_up(max(batch, 1), 8)
    if n_cores <= 1:
        # Sequential grid on 1 TC: one big tile whenever it fits the cap.
        tb = min(TILE_CAP, bp)
        bp = _round_up(bp, tb)
    else:
        # 2 TCs: at least n_cores tiles and an even tile count for balanced work.
        n_tiles = max(n_cores, _cdiv(bp, TILE_CAP))
        n_tiles = _round_up(n_tiles, n_cores)
        tb = _round_up(_cdiv(bp, n_tiles), 8)
        bp = tb * n_tiles
    return bp, tb, bp // tb


def _autoencoder_kernel(x_ref, we1_ref, wrest_ref, bias_ref, dec_ref, enc_ref):
    # x arrives as f32 straight from HBM; cast to bf16 in-kernel for the MXU.
    x = x_ref[...].astype(jnp.bfloat16)                       # (TB, D)

    be1 = bias_ref[:, :H]                                     # (1, H)
    b_fused = bias_ref[:, H:H + LP + H]                        # (1, LP+H)
    bd2 = bias_ref[:, H + LP + H:]                             # (1, D)

    # ---- Encoder layer 1 ----
    h = jnp.dot(x, we1_ref[...], preferred_element_type=jnp.float32) + be1
    h = jnp.maximum(h, 0.0).astype(jnp.bfloat16)               # (TB, H)

    # ---- Fused encoder-L2 + decoder-L1 pre-activation (one 128x256 MXU pass) ----
    zh = jnp.dot(h, wrest_ref[:, :LP + H],
                 preferred_element_type=jnp.float32) + b_fused  # (TB, LP+H)
    enc_ref[...] = zh[:, :LP].astype(enc_ref.dtype)             # latent (lane-dense, padded)
    hd = jnp.maximum(zh[:, LP:], 0.0).astype(jnp.bfloat16)      # (TB, H)

    # ---- Decoder layer 2 ----
    d = jnp.dot(hd, wrest_ref[:, LP + H:],
                preferred_element_type=jnp.float32) + bd2       # (TB, D)
    dec_ref[...] = d.astype(dec_ref.dtype)


def prepare_params(params):
    """One-time prep: pad latent to LP, fuse encoder-L2/decoder-L1, pack biases, cast bf16."""
    we1, be1, we2, be2, wd1, bd1, wd2, bd2 = params
    we2p = jnp.pad(we2, ((0, 0), (0, LP - L)))                 # (H, LP)
    be2p = jnp.pad(be2, ((0, 0), (0, LP - L)))                 # (1, LP)
    w_ed = jnp.dot(we2, wd1)                                   # (H, H)  encoder-L2 @ decoder-L1
    b_ed = jnp.dot(be2, wd1) + bd1                             # (1, H)
    w_fused = jnp.concatenate([we2p, w_ed], axis=1)            # (H, LP+H)
    b_fused = jnp.concatenate([be2p, b_ed], axis=1)            # (1, LP+H)

    we1_b = we1.astype(jnp.bfloat16)                           # (D, H)
    w_rest = jnp.concatenate([w_fused, wd2], axis=1).astype(jnp.bfloat16)   # (H, LP+H+D)
    bias = jnp.concatenate([be1, b_fused, bd2], axis=1).astype(jnp.float32)  # (1, H+LP+H+D)
    return we1_b, w_rest, bias


def audio_model_forward(x, prepared):
    """Returns (decoded, encoded), mirroring AudioModel.forward. `prepared` = prepare_params(...)."""
    we1_b, w_rest, bias = prepared
    batch = x.shape[0]

    bp, tb, n_tiles = _choose_tiling(batch, _num_tensorcores_per_chip())
    if bp != batch:
        x = jnp.pad(x, ((0, bp - batch), (0, 0)))

    def full_spec(shape):
        return pl.BlockSpec(shape, lambda i: (0,) * len(shape))

    grid_spec = pltpu.PrefetchScalarGridSpec(
        num_scalar_prefetch=0,
        grid=(n_tiles,),
        in_specs=[
            pl.BlockSpec((tb, D), lambda i: (i, 0)),        # x tile (f32, cast in-kernel)
            full_spec((D, H)),                              # encoder layer 1 weights (bf16)
            full_spec((H, LP + H + D)),                     # [fused enc-L2/dec-L1 | dec-L2] (bf16)
            full_spec((1, H + LP + H + D)),                 # all biases packed (f32)
        ],
        out_specs=[
            pl.BlockSpec((tb, D), lambda i: (i, 0)),        # decoded (bf16)
            pl.BlockSpec((tb, LP), lambda i: (i, 0)),       # encoded (bf16, lane-dense, padded)
        ],
    )

    flops = 2 * bp * (D * H + H * (LP + H) + H * D)
    bytes_accessed = (bp * D * 4                               # x (f32 read)
                      + (D * H + H * (LP + H + D)) * 2         # weights (bf16)
                      + (H + LP + H + D) * 4                   # biases (f32)
                      + bp * (D + LP) * 2)                     # outputs (bf16)

    decoded, encoded = pl.pallas_call(
        _autoencoder_kernel,
        out_shape=(
            jax.ShapeDtypeStruct((bp, D), jnp.bfloat16),
            jax.ShapeDtypeStruct((bp, LP), jnp.bfloat16),
        ),
        grid_spec=grid_spec,
        compiler_params=pltpu.CompilerParams(
            dimension_semantics=("parallel",),
            vmem_limit_bytes=32 * 1024 * 1024),
        cost_estimate=pl.CostEstimate(
            flops=flops, transcendentals=0, bytes_accessed=bytes_accessed),
    )(x.astype(jnp.float32), we1_b, w_rest, bias)

    return decoded[:batch], encoded[:batch, :L]


def _reference_forward(x, prepared):
    """Pure-JAX reference mirroring the kernel's fused, bf16-in / f32-accumulate numerics."""
    we1_b, w_rest, bias = prepared
    be1 = bias[:, :H]
    b_fused = bias[:, H:H + LP + H]
    bd2 = bias[:, H + LP + H:]
    xb = x.astype(jnp.bfloat16)
    h = jnp.maximum(jnp.dot(xb, we1_b, preferred_element_type=jnp.float32) + be1, 0.0)
    hb = h.astype(jnp.bfloat16)
    zh = jnp.dot(hb, w_rest[:, :LP + H], preferred_element_type=jnp.float32) + b_fused
    z = zh[:, :L]
    hd = jnp.maximum(zh[:, LP:], 0.0).astype(jnp.bfloat16)
    d = jnp.dot(hd, w_rest[:, LP + H:], preferred_element_type=jnp.float32) + bd2
    return d, z


def init_params(key):
    ks = jax.random.split(key, 8)
    we1 = jax.random.normal(ks[0], (D, H), jnp.float32) * 0.05
    be1 = jax.random.normal(ks[1], (1, H), jnp.float32) * 0.01
    we2 = jax.random.normal(ks[2], (H, L), jnp.float32) * 0.05
    be2 = jax.random.normal(ks[3], (1, L), jnp.float32) * 0.01
    wd1 = jax.random.normal(ks[4], (L, H), jnp.float32) * 0.05
    bd1 = jax.random.normal(ks[5], (1, H), jnp.float32) * 0.01
    wd2 = jax.random.normal(ks[6], (H, D), jnp.float32) * 0.05
    bd2 = jax.random.normal(ks[7], (1, D), jnp.float32) * 0.01
    return (we1, be1, we2, be2, wd1, bd1, wd2, bd2)


# TODO(synk): the variational encoder (reparameterization sampling) and the optional
# SequencePredictor head are config-gated off; only the deterministic
# encode/decode forward path is implemented.

if __name__ == "__main__":
    B = 512  # batch of track windows
    key = jax.random.PRNGKey(0)
    k_x, k_p = jax.random.split(key)
    x = jax.random.normal(k_x, (B, D), jnp.float32)
    params = init_params(k_p)
    prepared = prepare_params(params)          # one-time weight pad/fuse/cast

    decoded, encoded = audio_model_forward(x, prepared)
    jax.block_until_ready((decoded, encoded))

    ref_dec, ref_enc = _reference_forward(x, prepared)
    assert decoded.shape == (B, D) and encoded.shape == (B, L)
    assert jnp.allclose(decoded.astype(jnp.float32), ref_dec, atol=2e-2, rtol=2e-2)
    assert jnp.allclose(encoded.astype(jnp.float32), ref_enc, atol=2e-2, rtol=2e-2)

    print("KERNEL_OK")
</pallas_src>

<mosaic_0001>
module attributes {stable_mosaic.version = 11 : i64} {
  func.func @_autoencoder_kernel(%arg0: i32, %arg1: memref<512x256xf32, #tpu.memory_space<vmem>>, %arg2: memref<256x128xbf16, #tpu.memory_space<vmem>>, %arg3: memref<128x512xbf16, #tpu.memory_space<vmem>>, %arg4: memref<1x640xf32, #tpu.memory_space<vmem>>, %arg5: memref<512x256xbf16, #tpu.memory_space<vmem>>, %arg6: memref<512x128xbf16, #tpu.memory_space<vmem>>) attributes {dimension_semantics = [#tpu.dimension_semantics<parallel>], iteration_bounds = array<i64: 1>, scalar_prefetch = 0 : i64, scratch_operands = 0 : i64, tpu.core_type = #tpu.core_type<tc>, window_params = [{transform_indices = @transform_0, window_bounds = array<i64: 512, 256>}, {pipeline_mode = #tpu.pipeline_mode<synchronous>, transform_indices = @transform_1, window_bounds = array<i64: 256, 128>}, {pipeline_mode = #tpu.pipeline_mode<synchronous>, transform_indices = @transform_2, window_bounds = array<i64: 128, 512>}, {pipeline_mode = #tpu.pipeline_mode<synchronous>, transform_indices = @transform_3, window_bounds = array<i64: 1, 640>}, {transform_indices = @transform_4, window_bounds = array<i64: 512, 256>}, {transform_indices = @transform_5, window_bounds = array<i64: 512, 128>}]} {
    %c0 = arith.constant 0 : index
    %c0_0 = arith.constant 0 : index
    %0 = vector.load %arg1[%c0, %c0_0] : memref<512x256xf32, #tpu.memory_space<vmem>>, vector<512x256xf32>
    %1 = arith.truncf %0 : vector<512x256xf32> to vector<512x256xbf16>
    %c0_1 = arith.constant 0 : index
    %c0_2 = arith.constant 0 : index
    %2 = vector.load %arg4[%c0_1, %c0_2] : memref<1x640xf32, #tpu.memory_space<vmem>>, vector<1x128xf32>
    %c0_3 = arith.constant 0 : index
    %c128 = arith.constant 128 : index
    %3 = vector.load %arg4[%c0_3, %c128] : memref<1x640xf32, #tpu.memory_space<vmem>>, vector<1x256xf32>
    %c0_4 = arith.constant 0 : index
    %c384 = arith.constant 384 : index
    %4 = vector.load %arg4[%c0_4, %c384] : memref<1x640xf32, #tpu.memory_space<vmem>>, vector<1x256xf32>
    %c0_5 = arith.constant 0 : index
    %c0_6 = arith.constant 0 : index
    %5 = vector.load %arg2[%c0_5, %c0_6] : memref<256x128xbf16, #tpu.memory_space<vmem>>, vector<256x128xbf16>
    %cst = arith.constant dense<0.000000e+00> : vector<512x128xf32>
    %6 = tpu.matmul %1, %5, %cst {dimension_numbers = #tpu.dot_dimension_numbers<[1], [0], [0], [1], [0, 0, 1, 1], [], []>} : vector<512x256xbf16>, vector<256x128xbf16>, vector<512x128xf32> -> vector<512x128xf32>
    %7 = vector.broadcast %2 : vector<1x128xf32> to vector<512x128xf32>
    %8 = arith.addf %6, %7 : vector<512x128xf32>
    %cst_7 = arith.constant 0.000000e+00 : f32
    %9 = vector.broadcast %cst_7 : f32 to vector<512x128xf32>
    %10 = arith.maximumf %8, %9 : vector<512x128xf32>
    %11 = arith.truncf %10 : vector<512x128xf32> to vector<512x128xbf16>
    %c0_8 = arith.constant 0 : index
    %c0_9 = arith.constant 0 : index
    %12 = vector.load %arg3[%c0_8, %c0_9] : memref<128x512xbf16, #tpu.memory_space<vmem>>, vector<128x256xbf16>
    %cst_10 = arith.constant dense<0.000000e+00> : vector<512x256xf32>
    %13 = tpu.matmul %11, %12, %cst_10 {dimension_numbers = #tpu.dot_dimension_numbers<[1], [0], [0], [1], [0, 0, 1, 1], [], []>} : vector<512x128xbf16>, vector<128x256xbf16>, vector<512x256xf32> -> vector<512x256xf32>
    %14 = vector.broadcast %3 : vector<1x256xf32> to vector<512x256xf32>
    %15 = arith.addf %13, %14 : vector<512x256xf32>
    %16 = vector.extract_strided_slice %15 {offsets = [0, 0], sizes = [512, 128], strides = [1, 1]} : vector<512x256xf32> to vector<512x128xf32>
    %17 = arith.truncf %16 : vector<512x128xf32> to vector<512x128xbf16>
    %c0_11 = arith.constant 0 : index
    %c0_12 = arith.constant 0 : index
    %18 = vector.load %arg6[%c0_11, %c0_12] : memref<512x128xbf16, #tpu.memory_space<vmem>>, vector<512x128xbf16>
    tpu.vector_store %arg6[%c0_11, %c0_12], %17 {strides = array<i32>} : memref<512x128xbf16, #tpu.memory_space<vmem>>, vector<512x128xbf16>,
    %19 = vector.extract_strided_slice %15 {offsets = [0, 128], sizes = [512, 128], strides = [1, 1]} : vector<512x256xf32> to vector<512x128xf32>
    %cst_13 = arith.constant 0.000000e+00 : f32
    %20 = vector.broadcast %cst_13 : f32 to vector<512x128xf32>
    %21 = arith.maximumf %19, %20 : vector<512x128xf32>
    %22 = arith.truncf %21 : vector<512x128xf32> to vector<512x128xbf16>
    %c0_14 = arith.constant 0 : index
    %c256 = arith.constant 256 : index
    %23 = vector.load %arg3[%c0_14, %c256] : memref<128x512xbf16, #tpu.memory_space<vmem>>, vector<128x256xbf16>
    %cst_15 = arith.constant dense<0.000000e+00> : vector<512x256xf32>
    %24 = tpu.matmul %22, %23, %cst_15 {dimension_numbers = #tpu.dot_dimension_numbers<[1], [0], [0], [1], [0, 0, 1, 1], [], []>} : vector<512x128xbf16>, vector<128x256xbf16>, vector<512x256xf32> -> vector<512x256xf32>
    %25 = vector.broadcast %4 : vector<1x256xf32> to vector<512x256xf32>
    %26 = arith.addf %24, %25 : vector<512x256xf32>
    %27 = arith.truncf %26 : vector<512x256xf32> to vector<512x256xbf16>
    %c0_16 = arith.constant 0 : index
    %c0_17 = arith.constant 0 : index
    %28 = vector.load %arg5[%c0_16, %c0_17] : memref<512x256xbf16, #tpu.memory_space<vmem>>, vector<512x256xbf16>
    tpu.vector_store %arg5[%c0_16, %c0_17], %27 {strides = array<i32>} : memref<512x256xbf16, #tpu.memory_space<vmem>>, vector<512x256xbf16>,
    return
  }
  func.func @transform_0(%arg0: i32) -> (i32, i32) {
    %c0_i32 = arith.constant 0 : i32
    %c0_i32_0 = arith.constant 0 : i32
    return %arg0, %c0_i32 : i32, i32
  }
  func.func @transform_1(%arg0: i32) -> (i32, i32) {
    %c0_i32 = arith.constant 0 : i32
    %c0_i32_0 = arith.constant 0 : i32
    %c0_i32_1 = arith.constant 0 : i32
    return %c0_i32, %c0_i32_0 : i32, i32
  }
  func.func @transform_2(%arg0: i32) -> (i32, i32) {
    %c0_i32 = arith.constant 0 : i32
    %c0_i32_0 = arith.constant 0 : i32
    %c0_i32_1 = arith.constant 0 : i32
    return %c0_i32, %c0_i32_0 : i32, i32
  }
  func.func @transform_3(%arg0: i32) -> (i32, i32) {
    %c0_i32 = arith.constant 0 : i32
    %c0_i32_0 = arith.constant 0 : i32
    %c0_i32_1 = arith.constant 0 : i32
    return %c0_i32, %c0_i32_0 : i32, i32
  }
  func.func @transform_4(%arg0: i32) -> (i32, i32) {
    %c0_i32 = arith.constant 0 : i32
    %c0_i32_0 = arith.constant 0 : i32
    return %arg0, %c0_i32 : i32, i32
  }
  func.func @transform_5(%arg0: i32) -> (i32, i32) {
    %c0_i32 = arith.constant 0 : i32
    %c0_i32_0 = arith.constant 0 : i32
    return %arg0, %c0_i32 : i32, i32
  }
}

</mosaic_0001>

<llo_original>
// kernel: tpu_custom_call.1
$region0: #{tpu_custom_call.1}
  #allocation0 [shape = 'u32[]', space=smem, size = 0x4, offset = 0x4, fixed_abs, tag = 'smem constant byte address 0x4 - core index']
  #allocation1 [shape = 'u32[72,128]{1,0:T(1,128)}', space=vmem, size = 0x9000, scoped, tag = 'internal scratch']
  %s0 = inlined_call_operand.hbm [shape: f32[512,256], index: 0, kind: input, shape index: {}]
  %s1 = inlined_call_operand.hbm [shape: bf16[256,128], index: 1, kind: input, shape index: {}]
  %s2 = inlined_call_operand.hbm [shape: bf16[128,512], index: 2, kind: input, shape index: {}]
  %s3 = inlined_call_operand.hbm [shape: f32[1,640], index: 3, kind: input, shape index: {}]
  %s4 = inlined_call_operand.hbm [shape: bf16[512,256], index: 4, kind: output, shape index: {0}]
  %s5 = inlined_call_operand.hbm [shape: bf16[512,128], index: 5, kind: output, shape index: {1}]
  %6 = xla_tuple %s4, %s5
  %s7 = sld [smem:[#allocation0]]
  $region50: #{tpu_custom_call.1} parent=0
    _
  %s9 = ssub.s32 1, %s7
  %s10 = scalar_select 0, %s9, %s7
  $region1: #{tpu_custom_call.1} parent=0
    #allocation2 [shape = 'u8[524288]{0}', space=vmem, size = 0x80000, scoped, tag = 'input window, operand 0, single buffered']
    #allocation3 [shape = 's32[1]{0}', space=sflag, size = 0x4, scoped, tag = 'scoped memory for tpu_custom_call.1']
    #allocation4 [shape = 's32[1]{0}', space=sflag, size = 0x4, scoped, tag = 'scoped memory for tpu_custom_call.1']
    #allocation5 [shape = 'u8[65536]{0}', space=vmem, size = 0x10000, scoped, tag = 'input window, operand 1, single buffered']
    #allocation6 [shape = 's32[1]{0}', space=sflag, size = 0x4, scoped, tag = 'scoped memory for tpu_custom_call.1']
    #allocation7 [shape = 'u8[131072]{0}', space=vmem, size = 0x20000, scoped, tag = 'input window, operand 2, single buffered']
    #allocation8 [shape = 'u8[2560]{0}', space=vmem, size = 0xc00, scoped, tag = 'input window, operand 3, single buffered']
    #allocation9 [shape = 's32[1]{0}', space=sflag, size = 0x4, scoped, tag = 'scoped memory for tpu_custom_call.1']
    #allocation10 [shape = 'u8[262144]{0}', space=vmem, size = 0x40000, scoped, tag = 'output window, operand 0, single buffered']
    #allocation11 [shape = 'u8[131072]{0}', space=vmem, size = 0x20000, scoped, tag = 'output window, operand 1, single buffered']
    #allocation12 [shape = 's32[1]{0}', space=sflag, size = 0x4, scoped, tag = 'scoped memory for tpu_custom_call.1']
    %11 = vsyncpa [#allocation3], 0
    %12 = vsyncpa [#allocation6], 0
    %13 = vsyncpa [#allocation9], 0
    %14 = vsyncpa [#allocation4], 0
    %15 = vsyncpa [#allocation12], 0
    // Predicated region
    $region2: #{tpu_custom_call.1} parent=1 // pred_check
      _
    $region3: #{tpu_custom_call.1} parent=1 // pred_check_branch
      %17 = sbr.rel (0) target = $region5
    $region4: #{tpu_custom_call.1} parent=1 // pred_region
      %19 = vsyncadd [#allocation3], 0
      %s20 = sshll.u32 %s0, 4
      %s21 = int_to_ptr.hbm [resolvable:$true] %s20
      %s22 = sshll.u32 [#allocation2], 4
      %s23 = int_to_ptr.vmem [resolvable:$true] %s22
      %28 = dma.hbm_to_vmem [thread:$0]  %s21, 16384, %s23, [#allocation3], 256, 256, 16
    $region5: #{tpu_custom_call.1} parent=1 // pred_fallthru
      _
    // Predicated region
    $region6: #{tpu_custom_call.1} parent=1 // pred_check
      _
    $region7: #{tpu_custom_call.1} parent=1 // pred_check_branch
      %30 = sbr.rel (0) target = $region9
    $region8: #{tpu_custom_call.1} parent=1 // pred_region
      %32 = vsyncadd [#allocation6], 0
      %s33 = sshll.u32 %s1, 4
      %s34 = int_to_ptr.hbm [resolvable:$true] %s33
      %s35 = sshll.u32 [#allocation5], 4
      %s36 = int_to_ptr.vmem [resolvable:$true] %s35
      %41 = dma.hbm_to_vmem [thread:$0]  %s34, 2048, %s36, [#allocation6], 64, 64, 4
    $region9: #{tpu_custom_call.1} parent=1 // pred_fallthru
      _
    // Predicated region
    $region10: #{tpu_custom_call.1} parent=1 // pred_check
      _
    $region11: #{tpu_custom_call.1} parent=1 // pred_check_branch
      %43 = sbr.rel (0) target = $region13
    $region12: #{tpu_custom_call.1} parent=1 // pred_region
      %45 = vsyncadd [#allocation6], 0
      %s46 = sshll.u32 %s2, 4
      %s47 = int_to_ptr.hbm [resolvable:$true] %s46
      %s48 = sshll.u32 [#allocation7], 4
      %s49 = int_to_ptr.vmem [resolvable:$true] %s48
      %54 = dma.hbm_to_vmem [thread:$0]  %s47, 4096, %s49, [#allocation6], 256, 256, 16
    $region13: #{tpu_custom_call.1} parent=1 // pred_fallthru
      _
    // Predicated region
    $region14: #{tpu_custom_call.1} parent=1 // pred_check
      _
    $region15: #{tpu_custom_call.1} parent=1 // pred_check_branch
      %56 = sbr.rel (0) target = $region17
    $region16: #{tpu_custom_call.1} parent=1 // pred_region
      %58 = vsyncadd [#allocation9], 0
      %s60 = sshll.u32 %s3, 4
      %s61 = int_to_ptr.hbm [resolvable:$true] %s60
      %s62 = sshll.u32 [#allocation8], 4
      %s63 = int_to_ptr.vmem [resolvable:$true] %s62
      %65 = dma.hbm_to_vmem [thread:$0]  %s61, 80, %s63, [#allocation9]
    $region17: #{tpu_custom_call.1} parent=1 // pred_fallthru
      _
    // Predicated region
    $region18: #{tpu_custom_call.1} parent=1 // pred_check
      _
    $region19: #{tpu_custom_call.1} parent=1 // pred_check_branch
      %67 = sbr.rel (0) target = $region21
    $region20: #{tpu_custom_call.1} parent=1 // pred_region
      %69 = dma.done [#allocation3], 16384
    $region21: #{tpu_custom_call.1} parent=1 // pred_fallthru
      _
    // Predicated region
    $region22: #{tpu_custom_call.1} parent=1 // pred_check
      _
    $region23: #{tpu_custom_call.1} parent=1 // pred_check_branch
      %71 = sbr.rel (0) target = $region25
    $region24: #{tpu_custom_call.1} parent=1 // pred_region
      %73 = dma.done [#allocation6], 2048
    $region25: #{tpu_custom_call.1} parent=1 // pred_fallthru
      _
    // Predicated region
    $region26: #{tpu_custom_call.1} parent=1 // pred_check
      _
    $region27: #{tpu_custom_call.1} parent=1 // pred_check_branch
      %75 = sbr.rel (0) target = $region29
    $region28: #{tpu_custom_call.1} parent=1 // pred_region
      %77 = dma.done [#allocation6], 4096
    $region29: #{tpu_custom_call.1} parent=1 // pred_fallthru
      _
    // Predicated region
    $region30: #{tpu_custom_call.1} parent=1 // pred_check
      _
    $region31: #{tpu_custom_call.1} parent=1 // pred_check_branch
      %79 = sbr.rel (0) target = $region33
    $region32: #{tpu_custom_call.1} parent=1 // pred_region
      %81 = dma.done [#allocation9], 80
    $region33: #{tpu_custom_call.1} parent=1 // pred_fallthru
      _
    %v82 = vld [vmem:[#allocation2] sm:$0xff]
    %v83 = vld [vmem:[#allocation2 + $0x8] sm:$0xff]
    %v84 = vld [vmem:[#allocation2 + $0x10] sm:$0xff]
    %v85 = vld [vmem:[#allocation2 + $0x18] sm:$0xff]
    %v86 = vld [vmem:[#allocation2 + $0x20] sm:$0xff]
    %v87 = vld [vmem:[#allocation2 + $0x28] sm:$0xff]
    %v88 = vld [vmem:[#allocation2 + $0x30] sm:$0xff]
    %v89 = vld [vmem:[#allocation2 + $0x38] sm:$0xff]
    %v90 = vld [vmem:[#allocation2 + $0x40] sm:$0xff]
    %v91 = vld [vmem:[#allocation2 + $0x48] sm:$0xff]
    %v92 = vld [vmem:[#allocation2 + $0x50] sm:$0xff]
    %v93 = vld [vmem:[#allocation2 + $0x58] sm:$0xff]
    %v94 = vld [vmem:[#allocation2 + $0x60] sm:$0xff]
    %v95 = vld [vmem:[#allocation2 + $0x68] sm:$0xff]
    %v96 = vld [vmem:[#allocation2 + $0x70] sm:$0xff]
    %v97 = vld [vmem:[#allocation2 + $0x78] sm:$0xff]
    %v98 = vld [vmem:[#allocation2 + $0x80] sm:$0xff]
    %v99 = vld [vmem:[#allocation2 + $0x88] sm:$0xff]
    %v100 = vld [vmem:[#allocation2 + $0x90] sm:$0xff]
    %v101 = vld [vmem:[#allocation2 + $0x98] sm:$0xff]
    %v102 = vld [vmem:[#allocation2 + $0xa0] sm:$0xff]
    %v103 = vld [vmem:[#allocation2 + $0xa8] sm:$0xff]
    %v104 = vld [vmem:[#allocation2 + $0xb0] sm:$0xff]
    %v105 = vld [vmem:[#allocation2 + $0xb8] sm:$0xff]
    %v106 = vld [vmem:[#allocation2 + $0xc0] sm:$0xff]
    %v107 = vld [vmem:[#allocation2 + $0xc8] sm:$0xff]
    %v108 = vld [vmem:[#allocation2 + $0xd0] sm:$0xff]
    %v109 = vld [vmem:[#allocation2 + $0xd8] sm:$0xff]
    %v110 = vld [vmem:[#allocation2 + $0xe0] sm:$0xff]
    %v111 = vld [vmem:[#allocation2 + $0xe8] sm:$0xff]
    %v112 = vld [vmem:[#allocation2 + $0xf0] sm:$0xff]
    %v113 = vld [vmem:[#allocation2 + $0xf8] sm:$0xff]
    %v114 = vld [vmem:[#allocation2 + $0x100] sm:$0xff]
    %v115 = vld [vmem:[#allocation2 + $0x108] sm:$0xff]
    %v116 = vld [vmem:[#allocation2 + $0x110] sm:$0xff]
    %v117 = vld [vmem:[#allocation2 + $0x118] sm:$0xff]
    %v118 = vld [vmem:[#allocation2 + $0x120] sm:$0xff]
    %v119 = vld [vmem:[#allocation2 + $0x128] sm:$0xff]
    %v120 = vld [vmem:[#allocation2 + $0x130] sm:$0xff]
    %v121 = vld [vmem:[#allocation2 + $0x138] sm:$0xff]
    %v122 = vld [vmem:[#allocation2 + $0x140] sm:$0xff]
    %v123 = vld [vmem:[#allocation2 + $0x148] sm:$0xff]
    %v124 = vld [vmem:[#allocation2 + $0x150] sm:$0xff]
    %v125 = vld [vmem:[#allocation2 + $0x158] sm:$0xff]
    %v126 = vld [vmem:[#allocation2 + $0x160] sm:$0xff]
    %v127 = vld [vmem:[#allocation2 + $0x168] sm:$0xff]
    %v128 = vld [vmem:[#allocation2 + $0x170] sm:$0xff]
    %v129 = vld [vmem:[#allocation2 + $0x178] sm:$0xff]
    %v130 = vld [vmem:[#allocation2 + $0x180] sm:$0xff]
    %v131 = vld [vmem:[#allocation2 + $0x188] sm:$0xff]
    %v132 = vld [vmem:[#allocation2 + $0x190] sm:$0xff]
    %v133 = vld [vmem:[#allocation2 + $0x198] sm:$0xff]
    %v134 = vld [vmem:[#allocation2 + $0x1a0] sm:$0xff]
    %v135 = vld [vmem:[#allocation2 + $0x1a8] sm:$0xff]
    %v136 = vld [vmem:[#allocation2 + $0x1b0] sm:$0xff]
    %v137 = vld [vmem:[#allocation2 + $0x1b8] sm:$0xff]
    %v138 = vld [vmem:[#allocation2 + $0x1c0] sm:$0xff]
    %v139 = vld [vmem:[#allocation2 + $0x1c8] sm:$0xff]
    %v140 = vld [vmem:[#allocation2 + $0x1d0] sm:$0xff]
    %v141 = vld [vmem:[#allocation2 + $0x1d8] sm:$0xff]
    %v142 = vld [vmem:[#allocation2 + $0x1e0] sm:$0xff]
    %v143 = vld [vmem:[#allocation2 + $0x1e8] sm:$0xff]
    %v144 = vld [vmem:[#allocation2 + $0x1f0] sm:$0xff]
    %v145 = vld [vmem:[#allocation2 + $0x1f8] sm:$0xff]
    %v146 = vld [vmem:[#allocation2 + $0x200] sm:$0xff]
    %v147 = vld [vmem:[#allocation2 + $0x208] sm:$0xff]
    %v148 = vld [vmem:[#allocation2 + $0x210] sm:$0xff]
    %v149 = vld [vmem:[#allocation2 + $0x218] sm:$0xff]
    %v150 = vld [vmem:[#allocation2 + $0x220] sm:$0xff]
    %v151 = vld [vmem:[#allocation2 + $0x228] sm:$0xff]
    %v152 = vld [vmem:[#allocation2 + $0x230] sm:$0xff]
    %v153 = vld [vmem:[#allocation2 + $0x238] sm:$0xff]
    %v154 = vld [vmem:[#allocation2 + $0x240] sm:$0xff]
    %v155 = vld [vmem:[#allocation2 + $0x248] sm:$0xff]
    %v156 = vld [vmem:[#allocation2 + $0x250] sm:$0xff]
    %v157 = vld [vmem:[#allocation2 + $0x258] sm:$0xff]
    %v158 = vld [vmem:[#allocation2 + $0x260] sm:$0xff]
    %v159 = vld [vmem:[#allocation2 + $0x268] sm:$0xff]
    %v160 = vld [vmem:[#allocation2 + $0x270] sm:$0xff]
    %v161 = vld [vmem:[#allocation2 + $0x278] sm:$0xff]
    %v162 = vld [vmem:[#allocation2 + $0x280] sm:$0xff]
    %v163 = vld [vmem:[#allocation2 + $0x288] sm:$0xff]
    %v164 = vld [vmem:[#allocation2 + $0x290] sm:$0xff]
    %v165 = vld [vmem:[#allocation2 + $0x298] sm:$0xff]
    %v166 = vld [vmem:[#allocation2 + $0x2a0] sm:$0xff]
    %v167 = vld [vmem:[#allocation2 + $0x2a8] sm:$0xff]
    %v168 = vld [vmem:[#allocation2 + $0x2b0] sm:$0xff]
    %v169 = vld [vmem:[#allocation2 + $0x2b8] sm:$0xff]
    %v170 = vld [vmem:[#allocation2 + $0x2c0] sm:$0xff]
    %v171 = vld [vmem:[#allocation2 + $0x2c8] sm:$0xff]
    %v172 = vld [vmem:[#allocation2 + $0x2d0] sm:$0xff]
    %v173 = vld [vmem:[#allocation2 + $0x2d8] sm:$0xff]
    %v174 = vld [vmem:[#allocation2 + $0x2e0] sm:$0xff]
    %v175 = vld [vmem:[#allocation2 + $0x2e8] sm:$0xff]
    %v176 = vld [vmem:[#allocation2 + $0x2f0] sm:$0xff]
    %v177 = vld [vmem:[#allocation2 + $0x2f8] sm:$0xff]
    %v178 = vld [vmem:[#allocation2 + $0x300] sm:$0xff]
    %v179 = vld [vmem:[#allocation2 + $0x308] sm:$0xff]
    %v180 = vld [vmem:[#allocation2 + $0x310] sm:$0xff]
    %v181 = vld [vmem:[#allocation2 + $0x318] sm:$0xff]
    %v182 = vld [vmem:[#allocation2 + $0x320] sm:$0xff]
    %v183 = vld [vmem:[#allocation2 + $0x328] sm:$0xff]
    %v184 = vld [vmem:[#allocation2 + $0x330] sm:$0xff]
    %v185 = vld [vmem:[#allocation2 + $0x338] sm:$0xff]
    %v186 = vld [vmem:[#allocation2 + $0x340] sm:$0xff]
    %v187 = vld [vmem:[#allocation2 + $0x348] sm:$0xff]
    %v188 = vld [vmem:[#allocation2 + $0x350] sm:$0xff]
    %v189 = vld [vmem:[#allocation2 + $0x358] sm:$0xff]
    %v190 = vld [vmem:[#allocation2 + $0x360] sm:$0xff]
    %v191 = vld [vmem:[#allocation2 + $0x368] sm:$0xff]
    %v192 = vld [vmem:[#allocation2 + $0x370] sm:$0xff]
    %v193 = vld [vmem:[#allocation2 + $0x378] sm:$0xff]
    %v194 = vld [vmem:[#allocation2 + $0x380] sm:$0xff]
    %v195 = vld [vmem:[#allocation2 + $0x388] sm:$0xff]
    %v196 = vld [vmem:[#allocation2 + $0x390] sm:$0xff]
    %v197 = vld [vmem:[#allocation2 + $0x398] sm:$0xff]
    %v198 = vld [vmem:[#allocation2 + $0x3a0] sm:$0xff]
    %v199 = vld [vmem:[#allocation2 + $0x3a8] sm:$0xff]
    %v200 = vld [vmem:[#allocation2 + $0x3b0] sm:$0xff]
    %v201 = vld [vmem:[#allocation2 + $0x3b8] sm:$0xff]
    %v202 = vld [vmem:[#allocation2 + $0x3c0] sm:$0xff]
    %v203 = vld [vmem:[#allocation2 + $0x3c8] sm:$0xff]
    %v204 = vld [vmem:[#allocation2 + $0x3d0] sm:$0xff]
    %v205 = vld [vmem:[#allocation2 + $0x3d8] sm:$0xff]
    %v206 = vld [vmem:[#allocation2 + $0x3e0] sm:$0xff]
    %v207 = vld [vmem:[#allocation2 + $0x3e8] sm:$0xff]
    %v208 = vld [vmem:[#allocation2 + $0x3f0] sm:$0xff]
    %v209 = vld [vmem:[#allocation2 + $0x3f8] sm:$0xff]
    %v210 = vpack.c.bf16 %v84, %v82
    %v211 = vpack.c.bf16 %v85, %v83
    %v212 = vpack.c.bf16 %v88, %v86
    %v213 = vpack.c.bf16 %v89, %v87
    %v214 = vpack.c.bf16 %v92, %v90
    %v215 = vpack.c.bf16 %v93, %v91
    %v216 = vpack.c.bf16 %v96, %v94
    %v217 = vpack.c.bf16 %v97, %v95
    %v218 = vpack.c.bf16 %v100, %v98
    %v219 = vpack.c.bf16 %v101, %v99
    %v220 = vpack.c.bf16 %v104, %v102
    %v221 = vpack.c.bf16 %v105, %v103
    %v222 = vpack.c.bf16 %v108, %v106
    %v223 = vpack.c.bf16 %v109, %v107
    %v224 = vpack.c.bf16 %v112, %v110
    %v225 = vpack.c.bf16 %v113, %v111
    %v226 = vpack.c.bf16 %v116, %v114
    %v227 = vpack.c.bf16 %v117, %v115
    %v228 = vpack.c.bf16 %v120, %v118
    %v229 = vpack.c.bf16 %v121, %v119
    %v230 = vpack.c.bf16 %v124, %v122
    %v231 = vpack.c.bf16 %v125, %v123
    %v232 = vpack.c.bf16 %v128, %v126
    %v233 = vpack.c.bf16 %v129, %v127
    %v234 = vpack.c.bf16 %v132, %v130
    %v235 = vpack.c.bf16 %v133, %v131
    %v236 = vpack.c.bf16 %v136, %v134
    %v237 = vpack.c.bf16 %v137, %v135
    %v238 = vpack.c.bf16 %v140, %v138
    %v239 = vpack.c.bf16 %v141, %v139
    %v240 = vpack.c.bf16 %v144, %v142
    %v241 = vpack.c.bf16 %v145, %v143
    %v242 = vpack.c.bf16 %v148, %v146
    %v243 = vpack.c.bf16 %v149, %v147
    %v244 = vpack.c.bf16 %v152, %v150
    %v245 = vpack.c.bf16 %v153, %v151
    %v246 = vpack.c.bf16 %v156, %v154
    %v247 = vpack.c.bf16 %v157, %v155
    %v248 = vpack.c.bf16 %v160, %v158
    %v249 = vpack.c.bf16 %v161, %v159
    %v250 = vpack.c.bf16 %v164, %v162
    %v251 = vpack.c.bf16 %v165, %v163
    %v252 = vpack.c.bf16 %v168, %v166
    %v253 = vpack.c.bf16 %v169, %v167
    %v254 = vpack.c.bf16 %v172, %v170
    %v255 = vpack.c.bf16 %v173, %v171
    %v256 = vpack.c.bf16 %v176, %v174
    %v257 = vpack.c.bf16 %v177, %v175
    %v258 = vpack.c.bf16 %v180, %v178
    %v259 = vpack.c.bf16 %v181, %v179
    %v260 = vpack.c.bf16 %v184, %v182
    %v261 = vpack.c.bf16 %v185, %v183
    %v262 = vpack.c.bf16 %v188, %v186
    %v263 = vpack.c.bf16 %v189, %v187
    %v264 = vpack.c.bf16 %v192, %v190
    %v265 = vpack.c.bf16 %v193, %v191
    %v266 = vpack.c.bf16 %v196, %v194
    %v267 = vpack.c.bf16 %v197, %v195
    %v268 = vpack.c.bf16 %v200, %v198
    %v269 = vpack.c.bf16 %v201, %v199
    %v270 = vpack.c.bf16 %v204, %v202
    %v271 = vpack.c.bf16 %v205, %v203
    %v272 = vpack.c.bf16 %v208, %v206
    %v273 = vpack.c.bf16 %v209, %v207
    %v274 = vld [vmem:[#allocation8] sm:$0x1]
    %v275 = vld [vmem:[#allocation8 + $0x1] sm:$0x3]
    %v276 = vld [vmem:[#allocation8 + $0x3] sm:$0x3]
    %v277 = vld [vmem:[#allocation5] sm:$0xf]
    %v278 = vld [vmem:[#allocation5 + $0x4] sm:$0xf]
    %v279 = vld [vmem:[#allocation5 + $0x8] sm:$0xf]
    %v280 = vld [vmem:[#allocation5 + $0xc] sm:$0xf]
    %v281 = vld [vmem:[#allocation5 + $0x10] sm:$0xf]
    %v282 = vld [vmem:[#allocation5 + $0x14] sm:$0xf]
    %v283 = vld [vmem:[#allocation5 + $0x18] sm:$0xf]
    %v284 = vld [vmem:[#allocation5 + $0x1c] sm:$0xf]
    %v285 = vld [vmem:[#allocation5 + $0x20] sm:$0xf]
    %v286 = vld [vmem:[#allocation5 + $0x24] sm:$0xf]
    %v287 = vld [vmem:[#allocation5 + $0x28] sm:$0xf]
    %v288 = vld [vmem:[#allocation5 + $0x2c] sm:$0xf]
    %v289 = vld [vmem:[#allocation5 + $0x30] sm:$0xf]
    %v290 = vld [vmem:[#allocation5 + $0x34] sm:$0xf]
    %v291 = vld [vmem:[#allocation5 + $0x38] sm:$0xf]
    %v292 = vld [vmem:[#allocation5 + $0x3c] sm:$0xf]
    %v293 = vld [vmem:[#allocation5 + $0x40] sm:$0xf]
    %v294 = vld [vmem:[#allocation5 + $0x44] sm:$0xf]
    %v295 = vld [vmem:[#allocation5 + $0x48] sm:$0xf]
    %v296 = vld [vmem:[#allocation5 + $0x4c] sm:$0xf]
    %v297 = vld [vmem:[#allocation5 + $0x50] sm:$0xf]
    %v298 = vld [vmem:[#allocation5 + $0x54] sm:$0xf]
    %v299 = vld [vmem:[#allocation5 + $0x58] sm:$0xf]
    %v300 = vld [vmem:[#allocation5 + $0x5c] sm:$0xf]
    %v301 = vld [vmem:[#allocation5 + $0x60] sm:$0xf]
    %v302 = vld [vmem:[#allocation5 + $0x64] sm:$0xf]
    %v303 = vld [vmem:[#allocation5 + $0x68] sm:$0xf]
    %v304 = vld [vmem:[#allocation5 + $0x6c] sm:$0xf]
    %v305 = vld [vmem:[#allocation5 + $0x70] sm:$0xf]
    %v306 = vld [vmem:[#allocation5 + $0x74] sm:$0xf]
    %v307 = vld [vmem:[#allocation5 + $0x78] sm:$0xf]
    %v308 = vld [vmem:[#allocation5 + $0x7c] sm:$0xf]
    %v310 = vperm.slane %v274, 0
    %v344 = vunpack.c.l.b16 %v277
    %v345 = vunpack.c.l.b16 %v278
    %v346 = vunpack.c.l.b16 %v279
    %v347 = vunpack.c.l.b16 %v280
    %v348 = vunpack.c.l.b16 %v281
    %v349 = vunpack.c.l.b16 %v282
    %v350 = vunpack.c.l.b16 %v283
    %v351 = vunpack.c.l.b16 %v284
    %v352 = vunpack.c.l.b16 %v285
    %v353 = vunpack.c.l.b16 %v286
    %v354 = vunpack.c.l.b16 %v287
    %v355 = vunpack.c.l.b16 %v288
    %v356 = vunpack.c.l.b16 %v289
    %v357 = vunpack.c.l.b16 %v290
    %v358 = vunpack.c.l.b16 %v291
    %v359 = vunpack.c.l.b16 %v292
    %v360 = vunpack.c.l.b16 %v293
    %v361 = vunpack.c.l.b16 %v294
    %v362 = vunpack.c.l.b16 %v295
    %v363 = vunpack.c.l.b16 %v296
    %v364 = vunpack.c.l.b16 %v297
    %v365 = vunpack.c.l.b16 %v298
    %v366 = vunpack.c.l.b16 %v299
    %v367 = vunpack.c.l.b16 %v300
    %v368 = vunpack.c.l.b16 %v301
    %v369 = vunpack.c.l.b16 %v302
    %v370 = vunpack.c.l.b16 %v303
    %v371 = vunpack.c.l.b16 %v304
    %v372 = vunpack.c.l.b16 %v305
    %v373 = vunpack.c.l.b16 %v306
    %v374 = vunpack.c.l.b16 %v307
    %v375 = vunpack.c.l.b16 %v308
    %v376 = vpack.c.b16 %v345, %v344
    %v377 = vpack.c.b16 %v347, %v346
    %v378 = vpack.c.b16 %v349, %v348
    %v379 = vpack.c.b16 %v351, %v350
    %v380 = vpack.c.b16 %v353, %v352
    %v381 = vpack.c.b16 %v355, %v354
    %v382 = vpack.c.b16 %v357, %v356
    %v383 = vpack.c.b16 %v359, %v358
    %v384 = vpack.c.b16 %v361, %v360
    %v385 = vpack.c.b16 %v363, %v362
    %v386 = vpack.c.b16 %v365, %v364
    %v387 = vpack.c.b16 %v367, %v366
    %v388 = vpack.c.b16 %v369, %v368
    %v389 = vpack.c.b16 %v371, %v370
    %v390 = vpack.c.b16 %v373, %v372
    %v391 = vpack.c.b16 %v375, %v374
    %408 = vmatpush.bf16.msra.mxu0 %v383
    %409 = vmatpush.bf16.msra.mxu0 %v382
    %410 = vmatpush.bf16.msra.mxu0 %v381
    %411 = vmatpush.bf16.msra.mxu0 %v380
    %412 = vmatpush.bf16.msra.mxu0 %v379
    %413 = vmatpush.bf16.msra.mxu0 %v378
    %414 = vmatpush.bf16.msra.mxu0 %v377
    %415 = vmatpush.bf16.msra.mxu0 %v376
    %416 = vmatmul.bf16.gmra.mxu0 %v210
    %v417 = vpop.f32.mrf.mxu0
    %v418 = vadd.f32 %v310, %v417
    %v419 = vpop.f32.mrf.mxu0
    %v420 = vadd.f32 %v310, %v419
    %421 = vmatmul.bf16.gmra.mxu0 %v212
    %v422 = vpop.f32.mrf.mxu0
    %v423 = vadd.f32 %v310, %v422
    %v424 = vpop.f32.mrf.mxu0
    %v425 = vadd.f32 %v310, %v424
    %426 = vmatmul.bf16.gmra.mxu0 %v214
    %v427 = vpop.f32.mrf.mxu0
    %v428 = vadd.f32 %v310, %v427
    %v429 = vpop.f32.mrf.mxu0
    %v430 = vadd.f32 %v310, %v429
    %431 = vmatmul.bf16.gmra.mxu0 %v216
    %v432 = vpop.f32.mrf.mxu0
    %v433 = vadd.f32 %v310, %v432
    %v434 = vpop.f32.mrf.mxu0
    %v435 = vadd.f32 %v310, %v434
    %436 = vmatmul.bf16.gmra.mxu0 %v218
    %v437 = vpop.f32.mrf.mxu0
    %v438 = vadd.f32 %v310, %v437
    %v439 = vpop.f32.mrf.mxu0
    %v440 = vadd.f32 %v310, %v439
    %441 = vmatmul.bf16.gmra.mxu0 %v220
    %v442 = vpop.f32.mrf.mxu0
    %v443 = vadd.f32 %v310, %v442
    %v444 = vpop.f32.mrf.mxu0
    %v445 = vadd.f32 %v310, %v444
    %446 = vmatmul.bf16.gmra.mxu0 %v222
    %v447 = vpop.f32.mrf.mxu0
    %v448 = vadd.f32 %v310, %v447
    %v449 = vpop.f32.mrf.mxu0
    %v450 = vadd.f32 %v310, %v449
    %451 = vmatmul.bf16.gmra.mxu0 %v224
    %v452 = vpop.f32.mrf.mxu0
    %v453 = vadd.f32 %v310, %v452
    %v454 = vpop.f32.mrf.mxu0
    %v455 = vadd.f32 %v310, %v454
    %456 = vmatmul.bf16.gmra.mxu0 %v226
    %v457 = vpop.f32.mrf.mxu0
    %v458 = vadd.f32 %v310, %v457
    %v459 = vpop.f32.mrf.mxu0
    %v460 = vadd.f32 %v310, %v459
    %461 = vmatmul.bf16.gmra.mxu0 %v228
    %v462 = vpop.f32.mrf.mxu0
    %v463 = vadd.f32 %v310, %v462
    %v464 = vpop.f32.mrf.mxu0
    %v465 = vadd.f32 %v310, %v464
    %466 = vmatmul.bf16.gmra.mxu0 %v230
    %v467 = vpop.f32.mrf.mxu0
    %v468 = vadd.f32 %v310, %v467
    %v469 = vpop.f32.mrf.mxu0
    %v470 = vadd.f32 %v310, %v469
    %471 = vmatmul.bf16.gmra.mxu0 %v232
    %v472 = vpop.f32.mrf.mxu0
    %v473 = vadd.f32 %v310, %v472
    %v474 = vpop.f32.mrf.mxu0
    %v475 = vadd.f32 %v310, %v474
    %476 = vmatmul.bf16.gmra.mxu0 %v234
    %v477 = vpop.f32.mrf.mxu0
    %v478 = vadd.f32 %v310, %v477
    %v479 = vpop.f32.mrf.mxu0
    %v480 = vadd.f32 %v310, %v479
    %481 = vmatmul.bf16.gmra.mxu0 %v236
    %v482 = vpop.f32.mrf.mxu0
    %v483 = vadd.f32 %v310, %v482
    %v484 = vpop.f32.mrf.mxu0
    %v485 = vadd.f32 %v310, %v484
    %486 = vmatmul.bf16.gmra.mxu0 %v238
    %v487 = vpop.f32.mrf.mxu0
    %v488 = vadd.f32 %v310, %v487
    %v489 = vpop.f32.mrf.mxu0
    %v490 = vadd.f32 %v310, %v489
    %491 = vmatmul.bf16.gmra.mxu0 %v240
    %v492 = vpop.f32.mrf.mxu0
    %v493 = vadd.f32 %v310, %v492
    %v494 = vpop.f32.mrf.mxu0
    %v495 = vadd.f32 %v310, %v494
    %496 = vmatmul.bf16.gmra.mxu0 %v242
    %v497 = vpop.f32.mrf.mxu0
    %v498 = vadd.f32 %v310, %v497
    %v499 = vpop.f32.mrf.mxu0
    %v500 = vadd.f32 %v310, %v499
    %501 = vmatmul.bf16.gmra.mxu0 %v244
    %v502 = vpop.f32.mrf.mxu0
    %v503 = vadd.f32 %v310, %v502
    %v504 = vpop.f32.mrf.mxu0
    %v505 = vadd.f32 %v310, %v504
    %506 = vmatmul.bf16.gmra.mxu0 %v246
    %v507 = vpop.f32.mrf.mxu0
    %v508 = vadd.f32 %v310, %v507
    %v509 = vpop.f32.mrf.mxu0
    %v510 = vadd.f32 %v310, %v509
    %511 = vmatmul.bf16.gmra.mxu0 %v248
    %v512 = vpop.f32.mrf.mxu0
    %v513 = vadd.f32 %v310, %v512
    %v514 = vpop.f32.mrf.mxu0
    %v515 = vadd.f32 %v310, %v514
    %516 = vmatmul.bf16.gmra.mxu0 %v250
    %v517 = vpop.f32.mrf.mxu0
    %v518 = vadd.f32 %v310, %v517
    %v519 = vpop.f32.mrf.mxu0
    %v520 = vadd.f32 %v310, %v519
    %521 = vmatmul.bf16.gmra.mxu0 %v252
    %v522 = vpop.f32.mrf.mxu0
    %v523 = vadd.f32 %v310, %v522
    %v524 = vpop.f32.mrf.mxu0
    %v525 = vadd.f32 %v310, %v524
    %526 = vmatmul.bf16.gmra.mxu0 %v254
    %v527 = vpop.f32.mrf.mxu0
    %v528 = vadd.f32 %v310, %v527
    %v529 = vpop.f32.mrf.mxu0
    %v530 = vadd.f32 %v310, %v529
    %531 = vmatmul.bf16.gmra.mxu0 %v256
    %v532 = vpop.f32.mrf.mxu0
    %v533 = vadd.f32 %v310, %v532
    %v534 = vpop.f32.mrf.mxu0
    %v535 = vadd.f32 %v310, %v534
    %536 = vmatmul.bf16.gmra.mxu0 %v258
    %v537 = vpop.f32.mrf.mxu0
    %v538 = vadd.f32 %v310, %v537
    %v539 = vpop.f32.mrf.mxu0
    %v540 = vadd.f32 %v310, %v539
    %541 = vmatmul.bf16.gmra.mxu0 %v260
    %v542 = vpop.f32.mrf.mxu0
    %v543 = vadd.f32 %v310, %v542
    %v544 = vpop.f32.mrf.mxu0
    %v545 = vadd.f32 %v310, %v544
    %546 = vmatmul.bf16.gmra.mxu0 %v262
    %v547 = vpop.f32.mrf.mxu0
    %v548 = vadd.f32 %v310, %v547
    %v549 = vpop.f32.mrf.mxu0
    %v550 = vadd.f32 %v310, %v549
    %551 = vmatmul.bf16.gmra.mxu0 %v264
    %v552 = vpop.f32.mrf.mxu0
    %v553 = vadd.f32 %v310, %v552
    %v554 = vpop.f32.mrf.mxu0
    %v555 = vadd.f32 %v310, %v554
    %556 = vmatmul.bf16.gmra.mxu0 %v266
    %v557 = vpop.f32.mrf.mxu0
    %v558 = vadd.f32 %v310, %v557
    %v559 = vpop.f32.mrf.mxu0
    %v560 = vadd.f32 %v310, %v559
    %561 = vmatmul.bf16.gmra.mxu0 %v268
    %v562 = vpop.f32.mrf.mxu0
    %v563 = vadd.f32 %v310, %v562
    %v564 = vpop.f32.mrf.mxu0
    %v565 = vadd.f32 %v310, %v564
    %566 = vmatmul.bf16.gmra.mxu0 %v270
    %v567 = vpop.f32.mrf.mxu0
    %v568 = vadd.f32 %v310, %v567
    %v569 = vpop.f32.mrf.mxu0
    %v570 = vadd.f32 %v310, %v569
    %571 = vmatmul.bf16.gmra.mxu0 %v272
    %v572 = vpop.f32.mrf.mxu0
    %v573 = vadd.f32 %v310, %v572
    %v574 = vpop.f32.mrf.mxu0
    %v575 = vadd.f32 %v310, %v574
    %576 = vdwg.mxu0
    %577 = vmatpush.bf16.msra.mxu0 %v391
    %578 = vmatpush.bf16.msra.mxu0 %v390
    %579 = vmatpush.bf16.msra.mxu0 %v389
    %580 = vmatpush.bf16.msra.mxu0 %v388
    %581 = vmatpush.bf16.msra.mxu0 %v387
    %582 = vmatpush.bf16.msra.mxu0 %v386
    %583 = vmatpush.bf16.msra.mxu0 %v385
    %584 = vmatpush.bf16.msra.mxu0 %v384
    %585 = vmatmul.bf16.gmra.mxu0 %v211
    %v586 = vpop.f32.mrf.mxu0
    %v587 = vadd.f32 %v418, %v586
    %v588 = vpop.f32.mrf.mxu0
    %v589 = vadd.f32 %v420, %v588
    %590 = vmatmul.bf16.gmra.mxu0 %v213
    %v591 = vpop.f32.mrf.mxu0
    %v592 = vadd.f32 %v423, %v591
    %v593 = vpop.f32.mrf.mxu0
    %v594 = vadd.f32 %v425, %v593
    %595 = vmatmul.bf16.gmra.mxu0 %v215
    %v596 = vpop.f32.mrf.mxu0
    %v597 = vadd.f32 %v428, %v596
    %v598 = vpop.f32.mrf.mxu0
    %v599 = vadd.f32 %v430, %v598
    %600 = vmatmul.bf16.gmra.mxu0 %v217
    %v601 = vpop.f32.mrf.mxu0
    %v602 = vadd.f32 %v433, %v601
    %v603 = vpop.f32.mrf.mxu0
    %v604 = vadd.f32 %v435, %v603
    %605 = vmatmul.bf16.gmra.mxu0 %v219
    %v606 = vpop.f32.mrf.mxu0
    %v607 = vadd.f32 %v438, %v606
    %v608 = vpop.f32.mrf.mxu0
    %v609 = vadd.f32 %v440, %v608
    %610 = vmatmul.bf16.gmra.mxu0 %v221
    %v611 = vpop.f32.mrf.mxu0
    %v612 = vadd.f32 %v443, %v611
    %v613 = vpop.f32.mrf.mxu0
    %v614 = vadd.f32 %v445, %v613
    %615 = vmatmul.bf16.gmra.mxu0 %v223
    %v616 = vpop.f32.mrf.mxu0
    %v617 = vadd.f32 %v448, %v616
    %v618 = vpop.f32.mrf.mxu0
    %v619 = vadd.f32 %v450, %v618
    %620 = vmatmul.bf16.gmra.mxu0 %v225
    %v621 = vpop.f32.mrf.mxu0
    %v622 = vadd.f32 %v453, %v621
    %v623 = vpop.f32.mrf.mxu0
    %v624 = vadd.f32 %v455, %v623
    %625 = vmatmul.bf16.gmra.mxu0 %v227
    %v626 = vpop.f32.mrf.mxu0
    %v627 = vadd.f32 %v458, %v626
    %v628 = vpop.f32.mrf.mxu0
    %v629 = vadd.f32 %v460, %v628
    %630 = vmatmul.bf16.gmra.mxu0 %v229
    %v631 = vpop.f32.mrf.mxu0
    %v632 = vadd.f32 %v463, %v631
    %v633 = vpop.f32.mrf.mxu0
    %v634 = vadd.f32 %v465, %v633
    %635 = vmatmul.bf16.gmra.mxu0 %v231
    %v636 = vpop.f32.mrf.mxu0
    %v637 = vadd.f32 %v468, %v636
    %v638 = vpop.f32.mrf.mxu0
    %v639 = vadd.f32 %v470, %v638
    %640 = vmatmul.bf16.gmra.mxu0 %v233
    %v641 = vpop.f32.mrf.mxu0
    %v642 = vadd.f32 %v473, %v641
    %v643 = vpop.f32.mrf.mxu0
    %v644 = vadd.f32 %v475, %v643
    %645 = vmatmul.bf16.gmra.mxu0 %v235
    %v646 = vpop.f32.mrf.mxu0
    %v647 = vadd.f32 %v478, %v646
    %v648 = vpop.f32.mrf.mxu0
    %v649 = vadd.f32 %v480, %v648
    %650 = vmatmul.bf16.gmra.mxu0 %v237
    %v651 = vpop.f32.mrf.mxu0
    %v652 = vadd.f32 %v483, %v651
    %v653 = vpop.f32.mrf.mxu0
    %v654 = vadd.f32 %v485, %v653
    %655 = vmatmul.bf16.gmra.mxu0 %v239
    %v656 = vpop.f32.mrf.mxu0
    %v657 = vadd.f32 %v488, %v656
    %v658 = vpop.f32.mrf.mxu0
    %v659 = vadd.f32 %v490, %v658
    %660 = vmatmul.bf16.gmra.mxu0 %v241
    %v661 = vpop.f32.mrf.mxu0
    %v662 = vadd.f32 %v493, %v661
    %v663 = vpop.f32.mrf.mxu0
    %v664 = vadd.f32 %v495, %v663
    %665 = vmatmul.bf16.gmra.mxu0 %v243
    %v666 = vpop.f32.mrf.mxu0
    %v667 = vadd.f32 %v498, %v666
    %v668 = vpop.f32.mrf.mxu0
    %v669 = vadd.f32 %v500, %v668
    %670 = vmatmul.bf16.gmra.mxu0 %v245
    %v671 = vpop.f32.mrf.mxu0
    %v672 = vadd.f32 %v503, %v671
    %v673 = vpop.f32.mrf.mxu0
    %v674 = vadd.f32 %v505, %v673
    %675 = vmatmul.bf16.gmra.mxu0 %v247
    %v676 = vpop.f32.mrf.mxu0
    %v677 = vadd.f32 %v508, %v676
    %v678 = vpop.f32.mrf.mxu0
    %v679 = vadd.f32 %v510, %v678
    %680 = vmatmul.bf16.gmra.mxu0 %v249
    %v681 = vpop.f32.mrf.mxu0
    %v682 = vadd.f32 %v513, %v681
    %v683 = vpop.f32.mrf.mxu0
    %v684 = vadd.f32 %v515, %v683
    %685 = vmatmul.bf16.gmra.mxu0 %v251
    %v686 = vpop.f32.mrf.mxu0
    %v687 = vadd.f32 %v518, %v686
    %v688 = vpop.f32.mrf.mxu0
    %v689 = vadd.f32 %v520, %v688
    %690 = vmatmul.bf16.gmra.mxu0 %v253
    %v691 = vpop.f32.mrf.mxu0
    %v692 = vadd.f32 %v523, %v691
    %v693 = vpop.f32.mrf.mxu0
    %v694 = vadd.f32 %v525, %v693
    %695 = vmatmul.bf16.gmra.mxu0 %v255
    %v696 = vpop.f32.mrf.mxu0
    %v697 = vadd.f32 %v528, %v696
    %v698 = vpop.f32.mrf.mxu0
    %v699 = vadd.f32 %v530, %v698
    %700 = vmatmul.bf16.gmra.mxu0 %v257
    %v701 = vpop.f32.mrf.mxu0
    %v702 = vadd.f32 %v533, %v701
    %v703 = vpop.f32.mrf.mxu0
    %v704 = vadd.f32 %v535, %v703
    %705 = vmatmul.bf16.gmra.mxu0 %v259
    %v706 = vpop.f32.mrf.mxu0
    %v707 = vadd.f32 %v538, %v706
    %v708 = vpop.f32.mrf.mxu0
    %v709 = vadd.f32 %v540, %v708
    %710 = vmatmul.bf16.gmra.mxu0 %v261
    %v711 = vpop.f32.mrf.mxu0
    %v712 = vadd.f32 %v543, %v711
    %v713 = vpop.f32.mrf.mxu0
    %v714 = vadd.f32 %v545, %v713
    %715 = vmatmul.bf16.gmra.mxu0 %v263
    %v716 = vpop.f32.mrf.mxu0
    %v717 = vadd.f32 %v548, %v716
    %v718 = vpop.f32.mrf.mxu0
    %v719 = vadd.f32 %v550, %v718
    %720 = vmatmul.bf16.gmra.mxu0 %v265
    %v721 = vpop.f32.mrf.mxu0
    %v722 = vadd.f32 %v553, %v721
    %v723 = vpop.f32.mrf.mxu0
    %v724 = vadd.f32 %v555, %v723
    %725 = vmatmul.bf16.gmra.mxu0 %v267
    %v726 = vpop.f32.mrf.mxu0
    %v727 = vadd.f32 %v558, %v726
    %v728 = vpop.f32.mrf.mxu0
    %v729 = vadd.f32 %v560, %v728
    %730 = vmatmul.bf16.gmra.mxu0 %v269
    %v731 = vpop.f32.mrf.mxu0
    %v732 = vadd.f32 %v563, %v731
    %v733 = vpop.f32.mrf.mxu0
    %v734 = vadd.f32 %v565, %v733
    %735 = vmatmul.bf16.gmra.mxu0 %v271
    %v736 = vpop.f32.mrf.mxu0
    %v737 = vadd.f32 %v568, %v736
    %v738 = vpop.f32.mrf.mxu0
    %v739 = vadd.f32 %v570, %v738
    %740 = vmatmul.bf16.gmra.mxu0 %v273
    %v741 = vpop.f32.mrf.mxu0
    %v742 = vadd.f32 %v573, %v741
    %v743 = vpop.f32.mrf.mxu0
    %v744 = vadd.f32 %v575, %v743
    %745 = vdwg.mxu0
    %v746 = vmax.f32 %v587, 0.0
    %v747 = vmax.f32 %v589, 0.0
    %v748 = vmax.f32 %v592, 0.0
    %v749 = vmax.f32 %v594, 0.0
    %v750 = vmax.f32 %v597, 0.0
    %v751 = vmax.f32 %v599, 0.0
    %v752 = vmax.f32 %v602, 0.0
    %v753 = vmax.f32 %v604, 0.0
    %v754 = vmax.f32 %v607, 0.0
    %v755 = vmax.f32 %v609, 0.0
    %v756 = vmax.f32 %v612, 0.0
    %v757 = vmax.f32 %v614, 0.0
    %v758 = vmax.f32 %v617, 0.0
    %v759 = vmax.f32 %v619, 0.0
    %v760 = vmax.f32 %v622, 0.0
    %v761 = vmax.f32 %v624, 0.0
    %v762 = vmax.f32 %v627, 0.0
    %v763 = vmax.f32 %v629, 0.0
    %v764 = vmax.f32 %v632, 0.0
    %v765 = vmax.f32 %v634, 0.0
    %v766 = vmax.f32 %v637, 0.0
    %v767 = vmax.f32 %v639, 0.0
    %v768 = vmax.f32 %v642, 0.0
    %v769 = vmax.f32 %v644, 0.0
    %v770 = vmax.f32 %v647, 0.0
    %v771 = vmax.f32 %v649, 0.0
    %v772 = vmax.f32 %v652, 0.0
    %v773 = vmax.f32 %v654, 0.0
    %v774 = vmax.f32 %v657, 0.0
    %v775 = vmax.f32 %v659, 0.0
    %v776 = vmax.f32 %v662, 0.0
    %v777 = vmax.f32 %v664, 0.0
    %v778 = vmax.f32 %v667, 0.0
    %v779 = vmax.f32 %v669, 0.0
    %v780 = vmax.f32 %v672, 0.0
    %v781 = vmax.f32 %v674, 0.0
    %v782 = vmax.f32 %v677, 0.0
    %v783 = vmax.f32 %v679, 0.0
    %v784 = vmax.f32 %v682, 0.0
    %v785 = vmax.f32 %v684, 0.0
    %v786 = vmax.f32 %v687, 0.0
    %v787 = vmax.f32 %v689, 0.0
    %v788 = vmax.f32 %v692, 0.0
    %v789 = vmax.f32 %v694, 0.0
    %v790 = vmax.f32 %v697, 0.0
    %v791 = vmax.f32 %v699, 0.0
    %v792 = vmax.f32 %v702, 0.0
    %v793 = vmax.f32 %v704, 0.0
    %v794 = vmax.f32 %v707, 0.0
    %v795 = vmax.f32 %v709, 0.0
    %v796 = vmax.f32 %v712, 0.0
    %v797 = vmax.f32 %v714, 0.0
    %v798 = vmax.f32 %v717, 0.0
    %v799 = vmax.f32 %v719, 0.0
    %v800 = vmax.f32 %v722, 0.0
    %v801 = vmax.f32 %v724, 0.0
    %v802 = vmax.f32 %v727, 0.0
    %v803 = vmax.f32 %v729, 0.0
    %v804 = vmax.f32 %v732, 0.0
    %v805 = vmax.f32 %v734, 0.0
    %v806 = vmax.f32 %v737, 0.0
    %v807 = vmax.f32 %v739, 0.0
    %v808 = vmax.f32 %v742, 0.0
    %v809 = vmax.f32 %v744, 0.0
    %v810 = vpack.c.bf16 %v747, %v746
    %v811 = vpack.c.bf16 %v749, %v748
    %v812 = vpack.c.bf16 %v751, %v750
    %v813 = vpack.c.bf16 %v753, %v752
    %v814 = vpack.c.bf16 %v755, %v754
    %v815 = vpack.c.bf16 %v757, %v756
    %v816 = vpack.c.bf16 %v759, %v758
    %v817 = vpack.c.bf16 %v761, %v760
    %v818 = vpack.c.bf16 %v763, %v762
    %v819 = vpack.c.bf16 %v765, %v764
    %v820 = vpack.c.bf16 %v767, %v766
    %v821 = vpack.c.bf16 %v769, %v768
    %v822 = vpack.c.bf16 %v771, %v770
    %v823 = vpack.c.bf16 %v773, %v772
    %v824 = vpack.c.bf16 %v775, %v774
    %v825 = vpack.c.bf16 %v777, %v776
    %v826 = vpack.c.bf16 %v779, %v778
    %v827 = vpack.c.bf16 %v781, %v780
    %v828 = vpack.c.bf16 %v783, %v782
    %v829 = vpack.c.bf16 %v785, %v784
    %v830 = vpack.c.bf16 %v787, %v786
    %v831 = vpack.c.bf16 %v789, %v788
    %v832 = vpack.c.bf16 %v791, %v790
    %v833 = vpack.c.bf16 %v793, %v792
    %v834 = vpack.c.bf16 %v795, %v794
    %v835 = vpack.c.bf16 %v797, %v796
    %v836 = vpack.c.bf16 %v799, %v798
    %v837 = vpack.c.bf16 %v801, %v800
    %v838 = vpack.c.bf16 %v803, %v802
    %v839 = vpack.c.bf16 %v805, %v804
    %v840 = vpack.c.bf16 %v807, %v806
    %v841 = vpack.c.bf16 %v809, %v808
    %v842 = vld [vmem:[#allocation7] sm:$0xff]
    %v843 = vld [vmem:[#allocation7 + $0x10] sm:$0xff]
    %v844 = vld [vmem:[#allocation7 + $0x20] sm:$0xff]
    %v845 = vld [vmem:[#allocation7 + $0x30] sm:$0xff]
    %v846 = vld [vmem:[#allocation7 + $0x40] sm:$0xff]
    %v847 = vld [vmem:[#allocation7 + $0x50] sm:$0xff]
    %v848 = vld [vmem:[#allocation7 + $0x60] sm:$0xff]
    %v849 = vld [vmem:[#allocation7 + $0x70] sm:$0xff]
    %v850 = vld [vmem:[#allocation7 + $0x80] sm:$0xff]
    %v851 = vld [vmem:[#allocation7 + $0x90] sm:$0xff]
    %v852 = vld [vmem:[#allocation7 + $0xa0] sm:$0xff]
    %v853 = vld [vmem:[#allocation7 + $0xb0] sm:$0xff]
    %v854 = vld [vmem:[#allocation7 + $0xc0] sm:$0xff]
    %v855 = vld [vmem:[#allocation7 + $0xd0] sm:$0xff]
    %v856 = vld [vmem:[#allocation7 + $0xe0] sm:$0xff]
    %v857 = vld [vmem:[#allocation7 + $0xf0] sm:$0xff]
    %v859 = vperm.slane %v275, 0
    %v860 = vperm.slane %v275, 1
    %v879 = vunpack.c.l.b16 %v842
    %v880 = vunpack.c.h.b16 %v842
    %v881 = vunpack.c.l.b16 %v843
    %v882 = vunpack.c.h.b16 %v843
    %v883 = vunpack.c.l.b16 %v844
    %v884 = vunpack.c.h.b16 %v844
    %v885 = vunpack.c.l.b16 %v845
    %v886 = vunpack.c.h.b16 %v845
    %v887 = vunpack.c.l.b16 %v846
    %v888 = vunpack.c.h.b16 %v846
    %v889 = vunpack.c.l.b16 %v847
    %v890 = vunpack.c.h.b16 %v847
    %v891 = vunpack.c.l.b16 %v848
    %v892 = vunpack.c.h.b16 %v848
    %v893 = vunpack.c.l.b16 %v849
    %v894 = vunpack.c.h.b16 %v849
    %v895 = vunpack.c.l.b16 %v850
    %v896 = vunpack.c.h.b16 %v850
    %v897 = vunpack.c.l.b16 %v851
    %v898 = vunpack.c.h.b16 %v851
    %v899 = vunpack.c.l.b16 %v852
    %v900 = vunpack.c.h.b16 %v852
    %v901 = vunpack.c.l.b16 %v853
    %v902 = vunpack.c.h.b16 %v853
    %v903 = vunpack.c.l.b16 %v854
    %v904 = vunpack.c.h.b16 %v854
    %v905 = vunpack.c.l.b16 %v855
    %v906 = vunpack.c.h.b16 %v855
    %v907 = vunpack.c.l.b16 %v856
    %v908 = vunpack.c.h.b16 %v856
    %v909 = vunpack.c.l.b16 %v857
    %v910 = vunpack.c.h.b16 %v857
    %v911 = vpack.c.b16 %v881, %v879
    %v912 = vpack.c.b16 %v882, %v880
    %v913 = vpack.c.b16 %v885, %v883
    %v914 = vpack.c.b16 %v886, %v884
    %v915 = vpack.c.b16 %v889, %v887
    %v916 = vpack.c.b16 %v890, %v888
    %v917 = vpack.c.b16 %v893, %v891
    %v918 = vpack.c.b16 %v894, %v892
    %v919 = vpack.c.b16 %v897, %v895
    %v920 = vpack.c.b16 %v898, %v896
    %v921 = vpack.c.b16 %v901, %v899
    %v922 = vpack.c.b16 %v902, %v900
    %v923 = vpack.c.b16 %v905, %v903
    %v924 = vpack.c.b16 %v906, %v904
    %v925 = vpack.c.b16 %v909, %v907
    %v926 = vpack.c.b16 %v910, %v908
    %943 = vmatpush.bf16.msra.mxu0 %v925
    %944 = vmatpush.bf16.msra.mxu0 %v923
    %945 = vmatpush.bf16.msra.mxu0 %v921
    %946 = vmatpush.bf16.msra.mxu0 %v919
    %947 = vmatpush.bf16.msra.mxu0 %v917
    %948 = vmatpush.bf16.msra.mxu0 %v915
    %949 = vmatpush.bf16.msra.mxu0 %v913
    %950 = vmatpush.bf16.msra.mxu0 %v911
    %951 = vmatmul.bf16.gmra.mxu0 %v810
    %v952 = vpop.f32.mrf.mxu0
    %v953 = vadd.f32 %v859, %v952
    %v954 = vpop.f32.mrf.mxu0
    %v955 = vadd.f32 %v859, %v954
    %956 = vmatmul.bf16.gmra.mxu0 %v811
    %v957 = vpop.f32.mrf.mxu0
    %v958 = vadd.f32 %v859, %v957
    %v959 = vpop.f32.mrf.mxu0
    %v960 = vadd.f32 %v859, %v959
    %961 = vmatmul.bf16.gmra.mxu0 %v812
    %v962 = vpop.f32.mrf.mxu0
    %v963 = vadd.f32 %v859, %v962
    %v964 = vpop.f32.mrf.mxu0
    %v965 = vadd.f32 %v859, %v964
    %966 = vmatmul.bf16.gmra.mxu0 %v813
    %v967 = vpop.f32.mrf.mxu0
    %v968 = vadd.f32 %v859, %v967
    %v969 = vpop.f32.mrf.mxu0
    %v970 = vadd.f32 %v859, %v969
    %971 = vmatmul.bf16.gmra.mxu0 %v814
    %v972 = vpop.f32.mrf.mxu0
    %v973 = vadd.f32 %v859, %v972
    %v974 = vpop.f32.mrf.mxu0
    %v975 = vadd.f32 %v859, %v974
    %976 = vmatmul.bf16.gmra.mxu0 %v815
    %v977 = vpop.f32.mrf.mxu0
    %v978 = vadd.f32 %v859, %v977
    %v979 = vpop.f32.mrf.mxu0
    %v980 = vadd.f32 %v859, %v979
    %981 = vmatmul.bf16.gmra.mxu0 %v816
    %v982 = vpop.f32.mrf.mxu0
    %v983 = vadd.f32 %v859, %v982
    %v984 = vpop.f32.mrf.mxu0
    %v985 = vadd.f32 %v859, %v984
    %986 = vmatmul.bf16.gmra.mxu0 %v817
    %v987 = vpop.f32.mrf.mxu0
    %v988 = vadd.f32 %v859, %v987
    %v989 = vpop.f32.mrf.mxu0
    %v990 = vadd.f32 %v859, %v989
    %991 = vmatmul.bf16.gmra.mxu0 %v818
    %v992 = vpop.f32.mrf.mxu0
    %v993 = vadd.f32 %v859, %v992
    %v994 = vpop.f32.mrf.mxu0
    %v995 = vadd.f32 %v859, %v994
    %996 = vmatmul.bf16.gmra.mxu0 %v819
    %v997 = vpop.f32.mrf.mxu0
    %v998 = vadd.f32 %v859, %v997
    %v999 = vpop.f32.mrf.mxu0
    %v1000 = vadd.f32 %v859, %v999
    %1001 = vmatmul.bf16.gmra.mxu0 %v820
    %v1002 = vpop.f32.mrf.mxu0
    %v1003 = vadd.f32 %v859, %v1002
    %v1004 = vpop.f32.mrf.mxu0
    %v1005 = vadd.f32 %v859, %v1004
    %1006 = vmatmul.bf16.gmra.mxu0 %v821
    %v1007 = vpop.f32.mrf.mxu0
    %v1008 = vadd.f32 %v859, %v1007
    %v1009 = vpop.f32.mrf.mxu0
    %v1010 = vadd.f32 %v859, %v1009
    %1011 = vmatmul.bf16.gmra.mxu0 %v822
    %v1012 = vpop.f32.mrf.mxu0
    %v1013 = vadd.f32 %v859, %v1012
    %v1014 = vpop.f32.mrf.mxu0
    %v1015 = vadd.f32 %v859, %v1014
    %1016 = vmatmul.bf16.gmra.mxu0 %v823
    %v1017 = vpop.f32.mrf.mxu0
    %v1018 = vadd.f32 %v859, %v1017
    %v1019 = vpop.f32.mrf.mxu0
    %v1020 = vadd.f32 %v859, %v1019
    %1021 = vmatmul.bf16.gmra.mxu0 %v824
    %v1022 = vpop.f32.mrf.mxu0
    %v1023 = vadd.f32 %v859, %v1022
    %v1024 = vpop.f32.mrf.mxu0
    %v1025 = vadd.f32 %v859, %v1024
    %1026 = vmatmul.bf16.gmra.mxu0 %v825
    %v1027 = vpop.f32.mrf.mxu0
    %v1028 = vadd.f32 %v859, %v1027
    %v1029 = vpop.f32.mrf.mxu0
    %v1030 = vadd.f32 %v859, %v1029
    %1031 = vmatmul.bf16.gmra.mxu0 %v826
    %v1032 = vpop.f32.mrf.mxu0
    %v1033 = vadd.f32 %v859, %v1032
    %v1034 = vpop.f32.mrf.mxu0
    %v1035 = vadd.f32 %v859, %v1034
    %1036 = vmatmul.bf16.gmra.mxu0 %v827
    %v1037 = vpop.f32.mrf.mxu0
    %v1038 = vadd.f32 %v859, %v1037
    %v1039 = vpop.f32.mrf.mxu0
    %v1040 = vadd.f32 %v859, %v1039
    %1041 = vmatmul.bf16.gmra.mxu0 %v828
    %v1042 = vpop.f32.mrf.mxu0
    %v1043 = vadd.f32 %v859, %v1042
    %v1044 = vpop.f32.mrf.mxu0
    %v1045 = vadd.f32 %v859, %v1044
    %1046 = vmatmul.bf16.gmra.mxu0 %v829
    %v1047 = vpop.f32.mrf.mxu0
    %v1048 = vadd.f32 %v859, %v1047
    %v1049 = vpop.f32.mrf.mxu0
    %v1050 = vadd.f32 %v859, %v1049
    %1051 = vmatmul.bf16.gmra.mxu0 %v830
    %v1052 = vpop.f32.mrf.mxu0
    %v1053 = vadd.f32 %v859, %v1052
    %v1054 = vpop.f32.mrf.mxu0
    %v1055 = vadd.f32 %v859, %v1054
    %1056 = vmatmul.bf16.gmra.mxu0 %v831
    %v1057 = vpop.f32.mrf.mxu0
    %v1058 = vadd.f32 %v859, %v1057
    %v1059 = vpop.f32.mrf.mxu0
    %v1060 = vadd.f32 %v859, %v1059
    %1061 = vmatmul.bf16.gmra.mxu0 %v832
    %v1062 = vpop.f32.mrf.mxu0
    %v1063 = vadd.f32 %v859, %v1062
    %v1064 = vpop.f32.mrf.mxu0
    %v1065 = vadd.f32 %v859, %v1064
    %1066 = vmatmul.bf16.gmra.mxu0 %v833
    %v1067 = vpop.f32.mrf.mxu0
    %v1068 = vadd.f32 %v859, %v1067
    %v1069 = vpop.f32.mrf.mxu0
    %v1070 = vadd.f32 %v859, %v1069
    %1071 = vmatmul.bf16.gmra.mxu0 %v834
    %v1072 = vpop.f32.mrf.mxu0
    %v1073 = vadd.f32 %v859, %v1072
    %v1074 = vpop.f32.mrf.mxu0
    %v1075 = vadd.f32 %v859, %v1074
    %1076 = vmatmul.bf16.gmra.mxu0 %v835
    %v1077 = vpop.f32.mrf.mxu0
    %v1078 = vadd.f32 %v859, %v1077
    %v1079 = vpop.f32.mrf.mxu0
    %v1080 = vadd.f32 %v859, %v1079
    %1081 = vmatmul.bf16.gmra.mxu0 %v836
    %v1082 = vpop.f32.mrf.mxu0
    %v1083 = vadd.f32 %v859, %v1082
    %v1084 = vpop.f32.mrf.mxu0
    %v1085 = vadd.f32 %v859, %v1084
    %1086 = vmatmul.bf16.gmra.mxu0 %v837
    %v1087 = vpop.f32.mrf.mxu0
    %v1088 = vadd.f32 %v859, %v1087
    %v1089 = vpop.f32.mrf.mxu0
    %v1090 = vadd.f32 %v859, %v1089
    %1091 = vmatmul.bf16.gmra.mxu0 %v838
    %v1092 = vpop.f32.mrf.mxu0
    %v1093 = vadd.f32 %v859, %v1092
    %v1094 = vpop.f32.mrf.mxu0
    %v1095 = vadd.f32 %v859, %v1094
    %1096 = vmatmul.bf16.gmra.mxu0 %v839
    %v1097 = vpop.f32.mrf.mxu0
    %v1098 = vadd.f32 %v859, %v1097
    %v1099 = vpop.f32.mrf.mxu0
    %v1100 = vadd.f32 %v859, %v1099
    %1101 = vmatmul.bf16.gmra.mxu0 %v840
    %v1102 = vpop.f32.mrf.mxu0
    %v1103 = vadd.f32 %v859, %v1102
    %v1104 = vpop.f32.mrf.mxu0
    %v1105 = vadd.f32 %v859, %v1104
    %1106 = vmatmul.bf16.gmra.mxu0 %v841
    %v1107 = vpop.f32.mrf.mxu0
    %v1108 = vadd.f32 %v859, %v1107
    %v1109 = vpop.f32.mrf.mxu0
    %v1110 = vadd.f32 %v859, %v1109
    %1111 = vdwg.mxu0
    %1112 = vmatpush.bf16.msra.mxu0 %v926
    %1113 = vmatpush.bf16.msra.mxu0 %v924
    %1114 = vmatpush.bf16.msra.mxu0 %v922
    %1115 = vmatpush.bf16.msra.mxu0 %v920
    %1116 = vmatpush.bf16.msra.mxu0 %v918
    %1117 = vmatpush.bf16.msra.mxu0 %v916
    %1118 = vmatpush.bf16.msra.mxu0 %v914
    %1119 = vmatpush.bf16.msra.mxu0 %v912
    %1120 = vmatmul.bf16.gmra.mxu0 %v810
    %v1121 = vpop.f32.mrf.mxu0
    %v1122 = vadd.f32 %v860, %v1121
    %v1123 = vpop.f32.mrf.mxu0
    %v1124 = vadd.f32 %v860, %v1123
    %1125 = vmatmul.bf16.gmra.mxu0 %v811
    %v1126 = vpop.f32.mrf.mxu0
    %v1127 = vadd.f32 %v860, %v1126
    %v1128 = vpop.f32.mrf.mxu0
    %v1129 = vadd.f32 %v860, %v1128
    %1130 = vmatmul.bf16.gmra.mxu0 %v812
    %v1131 = vpop.f32.mrf.mxu0
    %v1132 = vadd.f32 %v860, %v1131
    %v1133 = vpop.f32.mrf.mxu0
    %v1134 = vadd.f32 %v860, %v1133
    %1135 = vmatmul.bf16.gmra.mxu0 %v813
    %v1136 = vpop.f32.mrf.mxu0
    %v1137 = vadd.f32 %v860, %v1136
    %v1138 = vpop.f32.mrf.mxu0
    %v1139 = vadd.f32 %v860, %v1138
    %1140 = vmatmul.bf16.gmra.mxu0 %v814
    %v1141 = vpop.f32.mrf.mxu0
    %v1142 = vadd.f32 %v860, %v1141
    %v1143 = vpop.f32.mrf.mxu0
    %v1144 = vadd.f32 %v860, %v1143
    %1145 = vmatmul.bf16.gmra.mxu0 %v815
    %v1146 = vpop.f32.mrf.mxu0
    %v1147 = vadd.f32 %v860, %v1146
    %v1148 = vpop.f32.mrf.mxu0
    %v1149 = vadd.f32 %v860, %v1148
    %1150 = vmatmul.bf16.gmra.mxu0 %v816
    %v1151 = vpop.f32.mrf.mxu0
    %v1152 = vadd.f32 %v860, %v1151
    %v1153 = vpop.f32.mrf.mxu0
    %v1154 = vadd.f32 %v860, %v1153
    %1155 = vmatmul.bf16.gmra.mxu0 %v817
    %v1156 = vpop.f32.mrf.mxu0
    %v1157 = vadd.f32 %v860, %v1156
    %v1158 = vpop.f32.mrf.mxu0
    %v1159 = vadd.f32 %v860, %v1158
    %1160 = vmatmul.bf16.gmra.mxu0 %v818
    %v1161 = vpop.f32.mrf.mxu0
    %v1162 = vadd.f32 %v860, %v1161
    %v1163 = vpop.f32.mrf.mxu0
    %v1164 = vadd.f32 %v860, %v1163
    %1165 = vmatmul.bf16.gmra.mxu0 %v819
    %v1166 = vpop.f32.mrf.mxu0
    %v1167 = vadd.f32 %v860, %v1166
    %v1168 = vpop.f32.mrf.mxu0
    %v1169 = vadd.f32 %v860, %v1168
    %1170 = vmatmul.bf16.gmra.mxu0 %v820
    %v1171 = vpop.f32.mrf.mxu0
    %v1172 = vadd.f32 %v860, %v1171
    %v1173 = vpop.f32.mrf.mxu0
    %v1174 = vadd.f32 %v860, %v1173
    %1175 = vmatmul.bf16.gmra.mxu0 %v821
    %v1176 = vpop.f32.mrf.mxu0
    %v1177 = vadd.f32 %v860, %v1176
    %v1178 = vpop.f32.mrf.mxu0
    %v1179 = vadd.f32 %v860, %v1178
    %1180 = vmatmul.bf16.gmra.mxu0 %v822
    %v1181 = vpop.f32.mrf.mxu0
    %v1182 = vadd.f32 %v860, %v1181
    %v1183 = vpop.f32.mrf.mxu0
    %v1184 = vadd.f32 %v860, %v1183
    %1185 = vmatmul.bf16.gmra.mxu0 %v823
    %v1186 = vpop.f32.mrf.mxu0
    %v1187 = vadd.f32 %v860, %v1186
    %v1188 = vpop.f32.mrf.mxu0
    %v1189 = vadd.f32 %v860, %v1188
    %1190 = vmatmul.bf16.gmra.mxu0 %v824
    %v1191 = vpop.f32.mrf.mxu0
    %v1192 = vadd.f32 %v860, %v1191
    %v1193 = vpop.f32.mrf.mxu0
    %v1194 = vadd.f32 %v860, %v1193
    %1195 = vmatmul.bf16.gmra.mxu0 %v825
    %v1196 = vpop.f32.mrf.mxu0
    %v1197 = vadd.f32 %v860, %v1196
    %v1198 = vpop.f32.mrf.mxu0
    %v1199 = vadd.f32 %v860, %v1198
    %1200 = vmatmul.bf16.gmra.mxu0 %v826
    %v1201 = vpop.f32.mrf.mxu0
    %v1202 = vadd.f32 %v860, %v1201
    %v1203 = vpop.f32.mrf.mxu0
    %v1204 = vadd.f32 %v860, %v1203
    %1205 = vmatmul.bf16.gmra.mxu0 %v827
    %v1206 = vpop.f32.mrf.mxu0
    %v1207 = vadd.f32 %v860, %v1206
    %v1208 = vpop.f32.mrf.mxu0
    %v1209 = vadd.f32 %v860, %v1208
    %1210 = vmatmul.bf16.gmra.mxu0 %v828
    %v1211 = vpop.f32.mrf.mxu0
    %v1212 = vadd.f32 %v860, %v1211
    %v1213 = vpop.f32.mrf.mxu0
    %v1214 = vadd.f32 %v860, %v1213
    %1215 = vmatmul.bf16.gmra.mxu0 %v829
    %v1216 = vpop.f32.mrf.mxu0
    %v1217 = vadd.f32 %v860, %v1216
    %v1218 = vpop.f32.mrf.mxu0
    %v1219 = vadd.f32 %v860, %v1218
    %1220 = vmatmul.bf16.gmra.mxu0 %v830
    %v1221 = vpop.f32.mrf.mxu0
    %v1222 = vadd.f32 %v860, %v1221
    %v1223 = vpop.f32.mrf.mxu0
    %v1224 = vadd.f32 %v860, %v1223
    %1225 = vmatmul.bf16.gmra.mxu0 %v831
    %v1226 = vpop.f32.mrf.mxu0
    %v1227 = vadd.f32 %v860, %v1226
    %v1228 = vpop.f32.mrf.mxu0
    %v1229 = vadd.f32 %v860, %v1228
    %1230 = vmatmul.bf16.gmra.mxu0 %v832
    %v1231 = vpop.f32.mrf.mxu0
    %v1232 = vadd.f32 %v860, %v1231
    %v1233 = vpop.f32.mrf.mxu0
    %v1234 = vadd.f32 %v860, %v1233
    %1235 = vmatmul.bf16.gmra.mxu0 %v833
    %v1236 = vpop.f32.mrf.mxu0
    %v1237 = vadd.f32 %v860, %v1236
    %v1238 = vpop.f32.mrf.mxu0
    %v1239 = vadd.f32 %v860, %v1238
    %1240 = vmatmul.bf16.gmra.mxu0 %v834
    %v1241 = vpop.f32.mrf.mxu0
    %v1242 = vadd.f32 %v860, %v1241
    %v1243 = vpop.f32.mrf.mxu0
    %v1244 = vadd.f32 %v860, %v1243
    %1245 = vmatmul.bf16.gmra.mxu0 %v835
    %v1246 = vpop.f32.mrf.mxu0
    %v1247 = vadd.f32 %v860, %v1246
    %v1248 = vpop.f32.mrf.mxu0
    %v1249 = vadd.f32 %v860, %v1248
    %1250 = vmatmul.bf16.gmra.mxu0 %v836
    %v1251 = vpop.f32.mrf.mxu0
    %v1252 = vadd.f32 %v860, %v1251
    %v1253 = vpop.f32.mrf.mxu0
    %v1254 = vadd.f32 %v860, %v1253
    %1255 = vmatmul.bf16.gmra.mxu0 %v837
    %v1256 = vpop.f32.mrf.mxu0
    %v1257 = vadd.f32 %v860, %v1256
    %v1258 = vpop.f32.mrf.mxu0
    %v1259 = vadd.f32 %v860, %v1258
    %1260 = vmatmul.bf16.gmra.mxu0 %v838
    %v1261 = vpop.f32.mrf.mxu0
    %v1262 = vadd.f32 %v860, %v1261
    %v1263 = vpop.f32.mrf.mxu0
    %v1264 = vadd.f32 %v860, %v1263
    %1265 = vmatmul.bf16.gmra.mxu0 %v839
    %v1266 = vpop.f32.mrf.mxu0
    %v1267 = vadd.f32 %v860, %v1266
    %v1268 = vpop.f32.mrf.mxu0
    %v1269 = vadd.f32 %v860, %v1268
    %1270 = vmatmul.bf16.gmra.mxu0 %v840
    %v1271 = vpop.f32.mrf.mxu0
    %v1272 = vadd.f32 %v860, %v1271
    %v1273 = vpop.f32.mrf.mxu0
    %v1274 = vadd.f32 %v860, %v1273
    %1275 = vmatmul.bf16.gmra.mxu0 %v841
    %v1276 = vpop.f32.mrf.mxu0
    %v1277 = vadd.f32 %v860, %v1276
    %v1278 = vpop.f32.mrf.mxu0
    %v1279 = vadd.f32 %v860, %v1278
    %1280 = vdwg.mxu0
    %v1281 = vpack.c.bf16 %v953, %v953
    %v1282 = vpack.c.bf16 %v955, %v955
    %v1283 = vpack.c.bf16 %v958, %v958
    %v1284 = vpack.c.bf16 %v960, %v960
    %v1285 = vpack.c.bf16 %v963, %v963
    %v1286 = vpack.c.bf16 %v965, %v965
    %v1287 = vpack.c.bf16 %v968, %v968
    %v1288 = vpack.c.bf16 %v970, %v970
    %v1289 = vpack.c.bf16 %v973, %v973
    %v1290 = vpack.c.bf16 %v975, %v975
    %v1291 = vpack.c.bf16 %v978, %v978
    %v1292 = vpack.c.bf16 %v980, %v980
    %v1293 = vpack.c.bf16 %v983, %v983
    %v1294 = vpack.c.bf16 %v985, %v985
    %v1295 = vpack.c.bf16 %v988, %v988
    %v1296 = vpack.c.bf16 %v990, %v990
    %v1297 = vpack.c.bf16 %v993, %v993
    %v1298 = vpack.c.bf16 %v995, %v995
    %v1299 = vpack.c.bf16 %v998, %v998
    %v1300 = vpack.c.bf16 %v1000, %v1000
    %v1301 = vpack.c.bf16 %v1003, %v1003
    %v1302 = vpack.c.bf16 %v1005, %v1005
    %v1303 = vpack.c.bf16 %v1008, %v1008
    %v1304 = vpack.c.bf16 %v1010, %v1010
    %v1305 = vpack.c.bf16 %v1013, %v1013
    %v1306 = vpack.c.bf16 %v1015, %v1015
    %v1307 = vpack.c.bf16 %v1018, %v1018
    %v1308 = vpack.c.bf16 %v1020, %v1020
    %v1309 = vpack.c.bf16 %v1023, %v1023
    %v1310 = vpack.c.bf16 %v1025, %v1025
    %v1311 = vpack.c.bf16 %v1028, %v1028
    %v1312 = vpack.c.bf16 %v1030, %v1030
    %v1313 = vpack.c.bf16 %v1033, %v1033
    %v1314 = vpack.c.bf16 %v1035, %v1035
    %v1315 = vpack.c.bf16 %v1038, %v1038
    %v1316 = vpack.c.bf16 %v1040, %v1040
    %v1317 = vpack.c.bf16 %v1043, %v1043
    %v1318 = vpack.c.bf16 %v1045, %v1045
    %v1319 = vpack.c.bf16 %v1048, %v1048
    %v1320 = vpack.c.bf16 %v1050, %v1050
    %v1321 = vpack.c.bf16 %v1053, %v1053
    %v1322 = vpack.c.bf16 %v1055, %v1055
    %v1323 = vpack.c.bf16 %v1058, %v1058
    %v1324 = vpack.c.bf16 %v1060, %v1060
    %v1325 = vpack.c.bf16 %v1063, %v1063
    %v1326 = vpack.c.bf16 %v1065, %v1065
    %v1327 = vpack.c.bf16 %v1068, %v1068
    %v1328 = vpack.c.bf16 %v1070, %v1070
    %v1329 = vpack.c.bf16 %v1073, %v1073
    %v1330 = vpack.c.bf16 %v1075, %v1075
    %v1331 = vpack.c.bf16 %v1078, %v1078
    %v1332 = vpack.c.bf16 %v1080, %v1080
    %v1333 = vpack.c.bf16 %v1083, %v1083
    %v1334 = vpack.c.bf16 %v1085, %v1085
    %v1335 = vpack.c.bf16 %v1088, %v1088
    %v1336 = vpack.c.bf16 %v1090, %v1090
    %v1337 = vpack.c.bf16 %v1093, %v1093
    %v1338 = vpack.c.bf16 %v1095, %v1095
    %v1339 = vpack.c.bf16 %v1098, %v1098
    %v1340 = vpack.c.bf16 %v1100, %v1100
    %v1341 = vpack.c.bf16 %v1103, %v1103
    %v1342 = vpack.c.bf16 %v1105, %v1105
    %v1343 = vpack.c.bf16 %v1108, %v1108
    %v1344 = vpack.c.bf16 %v1110, %v1110
    %1345 = vst [vmem:[#allocation11] sm:$0xf] %v1281
    %1346 = vst [vmem:[#allocation11 + $0x4] sm:$0xf] %v1282
    %1347 = vst [vmem:[#allocation11 + $0x8] sm:$0xf] %v1283
    %1348 = vst [vmem:[#allocation11 + $0xc] sm:$0xf] %v1284
    %1349 = vst [vmem:[#allocation11 + $0x10] sm:$0xf] %v1285
    %1350 = vst [vmem:[#allocation11 + $0x14] sm:$0xf] %v1286
    %1351 = vst [vmem:[#allocation11 + $0x18] sm:$0xf] %v1287
    %1352 = vst [vmem:[#allocation11 + $0x1c] sm:$0xf] %v1288
    %1353 = vst [vmem:[#allocation11 + $0x20] sm:$0xf] %v1289
    %1354 = vst [vmem:[#allocation11 + $0x24] sm:$0xf] %v1290
    %1355 = vst [vmem:[#allocation11 + $0x28] sm:$0xf] %v1291
    %1356 = vst [vmem:[#allocation11 + $0x2c] sm:$0xf] %v1292
    %1357 = vst [vmem:[#allocation11 + $0x30] sm:$0xf] %v1293
    %1358 = vst [vmem:[#allocation11 + $0x34] sm:$0xf] %v1294
    %1359 = vst [vmem:[#allocation11 + $0x38] sm:$0xf] %v1295
    %1360 = vst [vmem:[#allocation11 + $0x3c] sm:$0xf] %v1296
    %1361 = vst [vmem:[#allocation11 + $0x40] sm:$0xf] %v1297
    %1362 = vst [vmem:[#allocation11 + $0x44] sm:$0xf] %v1298
    %1363 = vst [vmem:[#allocation11 + $0x48] sm:$0xf] %v1299
    %1364 = vst [vmem:[#allocation11 + $0x4c] sm:$0xf] %v1300
    %1365 = vst [vmem:[#allocation11 + $0x50] sm:$0xf] %v1301
    %1366 = vst [vmem:[#allocation11 + $0x54] sm:$0xf] %v1302
    %1367 = vst [vmem:[#allocation11 + $0x58] sm:$0xf] %v1303
    %1368 = vst [vmem:[#allocation11 + $0x5c] sm:$0xf] %v1304
    %1369 = vst [vmem:[#allocation11 + $0x60] sm:$0xf] %v1305
    %1370 = vst [vmem:[#allocation11 + $0x64] sm:$0xf] %v1306
    %1371 = vst [vmem:[#allocation11 + $0x68] sm:$0xf] %v1307
    %1372 = vst [vmem:[#allocation11 + $0x6c] sm:$0xf] %v1308
    %1373 = vst [vmem:[#allocation11 + $0x70] sm:$0xf] %v1309
    %1374 = vst [vmem:[#allocation11 + $0x74] sm:$0xf] %v1310
    %1375 = vst [vmem:[#allocation11 + $0x78] sm:$0xf] %v1311
    %1376 = vst [vmem:[#allocation11 + $0x7c] sm:$0xf] %v1312
    %1377 = vst [vmem:[#allocation11 + $0x80] sm:$0xf] %v1313
    %1378 = vst [vmem:[#allocation11 + $0x84] sm:$0xf] %v1314
    %1379 = vst [vmem:[#allocation11 + $0x88] sm:$0xf] %v1315
    %1380 = vst [vmem:[#allocation11 + $0x8c] sm:$0xf] %v1316
    %1381 = vst [vmem:[#allocation11 + $0x90] sm:$0xf] %v1317
    %1382 = vst [vmem:[#allocation11 + $0x94] sm:$0xf] %v1318
    %1383 = vst [vmem:[#allocation11 + $0x98] sm:$0xf] %v1319
    %1384 = vst [vmem:[#allocation11 + $0x9c] sm:$0xf] %v1320
    %1385 = vst [vmem:[#allocation11 + $0xa0] sm:$0xf] %v1321
    %1386 = vst [vmem:[#allocation11 + $0xa4] sm:$0xf] %v1322
    %1387 = vst [vmem:[#allocation11 + $0xa8] sm:$0xf] %v1323
    %1388 = vst [vmem:[#allocation11 + $0xac] sm:$0xf] %v1324
    %1389 = vst [vmem:[#allocation11 + $0xb0] sm:$0xf] %v1325
    %1390 = vst [vmem:[#allocation11 + $0xb4] sm:$0xf] %v1326
    %1391 = vst [vmem:[#allocation11 + $0xb8] sm:$0xf] %v1327
    %1392 = vst [vmem:[#allocation11 + $0xbc] sm:$0xf] %v1328
    %1393 = vst [vmem:[#allocation11 + $0xc0] sm:$0xf] %v1329
    %1394 = vst [vmem:[#allocation11 + $0xc4] sm:$0xf] %v1330
    %1395 = vst [vmem:[#allocation11 + $0xc8] sm:$0xf] %v1331
    %1396 = vst [vmem:[#allocation11 + $0xcc] sm:$0xf] %v1332
    %1397 = vst [vmem:[#allocation11 + $0xd0] sm:$0xf] %v1333
    %1398 = vst [vmem:[#allocation11 + $0xd4] sm:$0xf] %v1334
    %1399 = vst [vmem:[#allocation11 + $0xd8] sm:$0xf] %v1335
    %1400 = vst [vmem:[#allocation11 + $0xdc] sm:$0xf] %v1336
    %1401 = vst [vmem:[#allocation11 + $0xe0] sm:$0xf] %v1337
    %1402 = vst [vmem:[#allocation11 + $0xe4] sm:$0xf] %v1338
    %1403 = vst [vmem:[#allocation11 + $0xe8] sm:$0xf] %v1339
    %1404 = vst [vmem:[#allocation11 + $0xec] sm:$0xf] %v1340
    %1405 = vst [vmem:[#allocation11 + $0xf0] sm:$0xf] %v1341
    %1406 = vst [vmem:[#allocation11 + $0xf4] sm:$0xf] %v1342
    %1407 = vst [vmem:[#allocation11 + $0xf8] sm:$0xf] %v1343
    %1408 = vst [vmem:[#allocation11 + $0xfc] sm:$0xf] %v1344
    %v1409 = vmax.f32 %v1122, 0.0
    %v1410 = vmax.f32 %v1124, 0.0
    %v1411 = vmax.f32 %v1127, 0.0
    %v1412 = vmax.f32 %v1129, 0.0
    %v1413 = vmax.f32 %v1132, 0.0
    %v1414 = vmax.f32 %v1134, 0.0
    %v1415 = vmax.f32 %v1137, 0.0
    %v1416 = vmax.f32 %v1139, 0.0
    %v1417 = vmax.f32 %v1142, 0.0
    %v1418 = vmax.f32 %v1144, 0.0
    %v1419 = vmax.f32 %v1147, 0.0
    %v1420 = vmax.f32 %v1149, 0.0
    %v1421 = vmax.f32 %v1152, 0.0
    %v1422 = vmax.f32 %v1154, 0.0
    %v1423 = vmax.f32 %v1157, 0.0
    %v1424 = vmax.f32 %v1159, 0.0
    %v1425 = vmax.f32 %v1162, 0.0
    %v1426 = vmax.f32 %v1164, 0.0
    %v1427 = vmax.f32 %v1167, 0.0
    %v1428 = vmax.f32 %v1169, 0.0
    %v1429 = vmax.f32 %v1172, 0.0
    %v1430 = vmax.f32 %v1174, 0.0
    %v1431 = vmax.f32 %v1177, 0.0
    %v1432 = vmax.f32 %v1179, 0.0
    %v1433 = vmax.f32 %v1182, 0.0
    %v1434 = vmax.f32 %v1184, 0.0
    %v1435 = vmax.f32 %v1187, 0.0
    %v1436 = vmax.f32 %v1189, 0.0
    %v1437 = vmax.f32 %v1192, 0.0
    %v1438 = vmax.f32 %v1194, 0.0
    %v1439 = vmax.f32 %v1197, 0.0
    %v1440 = vmax.f32 %v1199, 0.0
    %v1441 = vmax.f32 %v1202, 0.0
    %v1442 = vmax.f32 %v1204, 0.0
    %v1443 = vmax.f32 %v1207, 0.0
    %v1444 = vmax.f32 %v1209, 0.0
    %v1445 = vmax.f32 %v1212, 0.0
    %v1446 = vmax.f32 %v1214, 0.0
    %v1447 = vmax.f32 %v1217, 0.0
    %v1448 = vmax.f32 %v1219, 0.0
    %v1449 = vmax.f32 %v1222, 0.0
    %v1450 = vmax.f32 %v1224, 0.0
    %v1451 = vmax.f32 %v1227, 0.0
    %v1452 = vmax.f32 %v1229, 0.0
    %v1453 = vmax.f32 %v1232, 0.0
    %v1454 = vmax.f32 %v1234, 0.0
    %v1455 = vmax.f32 %v1237, 0.0
    %v1456 = vmax.f32 %v1239, 0.0
    %v1457 = vmax.f32 %v1242, 0.0
    %v1458 = vmax.f32 %v1244, 0.0
    %v1459 = vmax.f32 %v1247, 0.0
    %v1460 = vmax.f32 %v1249, 0.0
    %v1461 = vmax.f32 %v1252, 0.0
    %v1462 = vmax.f32 %v1254, 0.0
    %v1463 = vmax.f32 %v1257, 0.0
    %v1464 = vmax.f32 %v1259, 0.0
    %v1465 = vmax.f32 %v1262, 0.0
    %v1466 = vmax.f32 %v1264, 0.0
    %v1467 = vmax.f32 %v1267, 0.0
    %v1468 = vmax.f32 %v1269, 0.0
    %v1469 = vmax.f32 %v1272, 0.0
    %v1470 = vmax.f32 %v1274, 0.0
    %v1471 = vmax.f32 %v1277, 0.0
    %v1472 = vmax.f32 %v1279, 0.0
    %v1473 = vpack.c.bf16 %v1410, %v1409
    %v1474 = vpack.c.bf16 %v1412, %v1411
    %v1475 = vpack.c.bf16 %v1414, %v1413
    %v1476 = vpack.c.bf16 %v1416, %v1415
    %v1477 = vpack.c.bf16 %v1418, %v1417
    %v1478 = vpack.c.bf16 %v1420, %v1419
    %v1479 = vpack.c.bf16 %v1422, %v1421
    %v1480 = vpack.c.bf16 %v1424, %v1423
    %v1481 = vpack.c.bf16 %v1426, %v1425
    %v1482 = vpack.c.bf16 %v1428, %v1427
    %v1483 = vpack.c.bf16 %v1430, %v1429
    %v1484 = vpack.c.bf16 %v1432, %v1431
    %v1485 = vpack.c.bf16 %v1434, %v1433
    %v1486 = vpack.c.bf16 %v1436, %v1435
    %v1487 = vpack.c.bf16 %v1438, %v1437
    %v1488 = vpack.c.bf16 %v1440, %v1439
    %v1489 = vpack.c.bf16 %v1442, %v1441
    %v1490 = vpack.c.bf16 %v1444, %v1443
    %v1491 = vpack.c.bf16 %v1446, %v1445
    %v1492 = vpack.c.bf16 %v1448, %v1447
    %v1493 = vpack.c.bf16 %v1450, %v1449
    %v1494 = vpack.c.bf16 %v1452, %v1451
    %v1495 = vpack.c.bf16 %v1454, %v1453
    %v1496 = vpack.c.bf16 %v1456, %v1455
    %v1497 = vpack.c.bf16 %v1458, %v1457
    %v1498 = vpack.c.bf16 %v1460, %v1459
    %v1499 = vpack.c.bf16 %v1462, %v1461
    %v1500 = vpack.c.bf16 %v1464, %v1463
    %v1501 = vpack.c.bf16 %v1466, %v1465
    %v1502 = vpack.c.bf16 %v1468, %v1467
    %v1503 = vpack.c.bf16 %v1470, %v1469
    %v1504 = vpack.c.bf16 %v1472, %v1471
    %v1505 = vld [vmem:[#allocation7 + $0x8] sm:$0xff]
    %v1506 = vld [vmem:[#allocation7 + $0x18] sm:$0xff]
    %v1507 = vld [vmem:[#allocation7 + $0x28] sm:$0xff]
    %v1508 = vld [vmem:[#allocation7 + $0x38] sm:$0xff]
    %v1509 = vld [vmem:[#allocation7 + $0x48] sm:$0xff]
    %v1510 = vld [vmem:[#allocation7 + $0x58] sm:$0xff]
    %v1511 = vld [vmem:[#allocation7 + $0x68] sm:$0xff]
    %v1512 = vld [vmem:[#allocation7 + $0x78] sm:$0xff]
    %v1513 = vld [vmem:[#allocation7 + $0x88] sm:$0xff]
    %v1514 = vld [vmem:[#allocation7 + $0x98] sm:$0xff]
    %v1515 = vld [vmem:[#allocation7 + $0xa8] sm:$0xff]
    %v1516 = vld [vmem:[#allocation7 + $0xb8] sm:$0xff]
    %v1517 = vld [vmem:[#allocation7 + $0xc8] sm:$0xff]
    %v1518 = vld [vmem:[#allocation7 + $0xd8] sm:$0xff]
    %v1519 = vld [vmem:[#allocation7 + $0xe8] sm:$0xff]
    %v1520 = vld [vmem:[#allocation7 + $0xf8] sm:$0xff]
    %v1522 = vperm.slane %v276, 0
    %v1523 = vperm.slane %v276, 1
    %v1542 = vunpack.c.l.b16 %v1505
    %v1543 = vunpack.c.h.b16 %v1505
    %v1544 = vunpack.c.l.b16 %v1506
    %v1545 = vunpack.c.h.b16 %v1506
    %v1546 = vunpack.c.l.b16 %v1507
    %v1547 = vunpack.c.h.b16 %v1507
    %v1548 = vunpack.c.l.b16 %v1508
    %v1549 = vunpack.c.h.b16 %v1508
    %v1550 = vunpack.c.l.b16 %v1509
    %v1551 = vunpack.c.h.b16 %v1509
    %v1552 = vunpack.c.l.b16 %v1510
    %v1553 = vunpack.c.h.b16 %v1510
    %v1554 = vunpack.c.l.b16 %v1511
    %v1555 = vunpack.c.h.b16 %v1511
    %v1556 = vunpack.c.l.b16 %v1512
    %v1557 = vunpack.c.h.b16 %v1512
    %v1558 = vunpack.c.l.b16 %v1513
    %v1559 = vunpack.c.h.b16 %v1513
    %v1560 = vunpack.c.l.b16 %v1514
    %v1561 = vunpack.c.h.b16 %v1514
    %v1562 = vunpack.c.l.b16 %v1515
    %v1563 = vunpack.c.h.b16 %v1515
    %v1564 = vunpack.c.l.b16 %v1516
    %v1565 = vunpack.c.h.b16 %v1516
    %v1566 = vunpack.c.l.b16 %v1517
    %v1567 = vunpack.c.h.b16 %v1517
    %v1568 = vunpack.c.l.b16 %v1518
    %v1569 = vunpack.c.h.b16 %v1518
    %v1570 = vunpack.c.l.b16 %v1519
    %v1571 = vunpack.c.h.b16 %v1519
    %v1572 = vunpack.c.l.b16 %v1520
    %v1573 = vunpack.c.h.b16 %v1520
    %v1574 = vpack.c.b16 %v1544, %v1542
    %v1575 = vpack.c.b16 %v1545, %v1543
    %v1576 = vpack.c.b16 %v1548, %v1546
    %v1577 = vpack.c.b16 %v1549, %v1547
    %v1578 = vpack.c.b16 %v1552, %v1550
    %v1579 = vpack.c.b16 %v1553, %v1551
    %v1580 = vpack.c.b16 %v1556, %v1554
    %v1581 = vpack.c.b16 %v1557, %v1555
    %v1582 = vpack.c.b16 %v1560, %v1558
    %v1583 = vpack.c.b16 %v1561, %v1559
    %v1584 = vpack.c.b16 %v1564, %v1562
    %v1585 = vpack.c.b16 %v1565, %v1563
    %v1586 = vpack.c.b16 %v1568, %v1566
    %v1587 = vpack.c.b16 %v1569, %v1567
    %v1588 = vpack.c.b16 %v1572, %v1570
    %v1589 = vpack.c.b16 %v1573, %v1571
    %1606 = vmatpush.bf16.msra.mxu0 %v1588
    %1607 = vmatpush.bf16.msra.mxu0 %v1586
    %1608 = vmatpush.bf16.msra.mxu0 %v1584
    %1609 = vmatpush.bf16.msra.mxu0 %v1582
    %1610 = vmatpush.bf16.msra.mxu0 %v1580
    %1611 = vmatpush.bf16.msra.mxu0 %v1578
    %1612 = vmatpush.bf16.msra.mxu0 %v1576
    %1613 = vmatpush.bf16.msra.mxu0 %v1574
    %1614 = vmatmul.bf16.gmra.mxu0 %v1473
    %v1615 = vpop.f32.mrf.mxu0
    %v1616 = vadd.f32 %v1522, %v1615
    %v1617 = vpop.f32.mrf.mxu0
    %v1618 = vadd.f32 %v1522, %v1617
    %1619 = vmatmul.bf16.gmra.mxu0 %v1474
    %v1620 = vpop.f32.mrf.mxu0
    %v1621 = vadd.f32 %v1522, %v1620
    %v1622 = vpop.f32.mrf.mxu0
    %v1623 = vadd.f32 %v1522, %v1622
    %1624 = vmatmul.bf16.gmra.mxu0 %v1475
    %v1625 = vpop.f32.mrf.mxu0
    %v1626 = vadd.f32 %v1522, %v1625
    %v1627 = vpop.f32.mrf.mxu0
    %v1628 = vadd.f32 %v1522, %v1627
    %1629 = vmatmul.bf16.gmra.mxu0 %v1476
    %v1630 = vpop.f32.mrf.mxu0
    %v1631 = vadd.f32 %v1522, %v1630
    %v1632 = vpop.f32.mrf.mxu0
    %v1633 = vadd.f32 %v1522, %v1632
    %1634 = vmatmul.bf16.gmra.mxu0 %v1477
    %v1635 = vpop.f32.mrf.mxu0
    %v1636 = vadd.f32 %v1522, %v1635
    %v1637 = vpop.f32.mrf.mxu0
    %v1638 = vadd.f32 %v1522, %v1637
    %1639 = vmatmul.bf16.gmra.mxu0 %v1478
    %v1640 = vpop.f32.mrf.mxu0
    %v1641 = vadd.f32 %v1522, %v1640
    %v1642 = vpop.f32.mrf.mxu0
    %v1643 = vadd.f32 %v1522, %v1642
    %1644 = vmatmul.bf16.gmra.mxu0 %v1479
    %v1645 = vpop.f32.mrf.mxu0
    %v1646 = vadd.f32 %v1522, %v1645
    %v1647 = vpop.f32.mrf.mxu0
    %v1648 = vadd.f32 %v1522, %v1647
    %1649 = vmatmul.bf16.gmra.mxu0 %v1480
    %v1650 = vpop.f32.mrf.mxu0
    %v1651 = vadd.f32 %v1522, %v1650
    %v1652 = vpop.f32.mrf.mxu0
    %v1653 = vadd.f32 %v1522, %v1652
    %1654 = vmatmul.bf16.gmra.mxu0 %v1481
    %v1655 = vpop.f32.mrf.mxu0
    %v1656 = vadd.f32 %v1522, %v1655
    %v1657 = vpop.f32.mrf.mxu0
    %v1658 = vadd.f32 %v1522, %v1657
    %1659 = vmatmul.bf16.gmra.mxu0 %v1482
    %v1660 = vpop.f32.mrf.mxu0
    %v1661 = vadd.f32 %v1522, %v1660
    %v1662 = vpop.f32.mrf.mxu0
    %v1663 = vadd.f32 %v1522, %v1662
    %1664 = vmatmul.bf16.gmra.mxu0 %v1483
    %v1665 = vpop.f32.mrf.mxu0
    %v1666 = vadd.f32 %v1522, %v1665
    %v1667 = vpop.f32.mrf.mxu0
    %v1668 = vadd.f32 %v1522, %v1667
    %1669 = vmatmul.bf16.gmra.mxu0 %v1484
    %v1670 = vpop.f32.mrf.mxu0
    %v1671 = vadd.f32 %v1522, %v1670
    %v1672 = vpop.f32.mrf.mxu0
    %v1673 = vadd.f32 %v1522, %v1672
    %1674 = vmatmul.bf16.gmra.mxu0 %v1485
    %v1675 = vpop.f32.mrf.mxu0
    %v1676 = vadd.f32 %v1522, %v1675
    %v1677 = vpop.f32.mrf.mxu0
    %v1678 = vadd.f32 %v1522, %v1677
    %1679 = vmatmul.bf16.gmra.mxu0 %v1486
    %v1680 = vpop.f32.mrf.mxu0
    %v1681 = vadd.f32 %v1522, %v1680
    %v1682 = vpop.f32.mrf.mxu0
    %v1683 = vadd.f32 %v1522, %v1682
    %1684 = vmatmul.bf16.gmra.mxu0 %v1487
    %v1685 = vpop.f32.mrf.mxu0
    %v1686 = vadd.f32 %v1522, %v1685
    %v1687 = vpop.f32.mrf.mxu0
    %v1688 = vadd.f32 %v1522, %v1687
    %1689 = vmatmul.bf16.gmra.mxu0 %v1488
    %v1690 = vpop.f32.mrf.mxu0
    %v1691 = vadd.f32 %v1522, %v1690
    %v1692 = vpop.f32.mrf.mxu0
    %v1693 = vadd.f32 %v1522, %v1692
    %1694 = vmatmul.bf16.gmra.mxu0 %v1489
    %v1695 = vpop.f32.mrf.mxu0
    %v1696 = vadd.f32 %v1522, %v1695
    %v1697 = vpop.f32.mrf.mxu0
    %v1698 = vadd.f32 %v1522, %v1697
    %1699 = vmatmul.bf16.gmra.mxu0 %v1490
    %v1700 = vpop.f32.mrf.mxu0
    %v1701 = vadd.f32 %v1522, %v1700
    %v1702 = vpop.f32.mrf.mxu0
    %v1703 = vadd.f32 %v1522, %v1702
    %1704 = vmatmul.bf16.gmra.mxu0 %v1491
    %v1705 = vpop.f32.mrf.mxu0
    %v1706 = vadd.f32 %v1522, %v1705
    %v1707 = vpop.f32.mrf.mxu0
    %v1708 = vadd.f32 %v1522, %v1707
    %1709 = vmatmul.bf16.gmra.mxu0 %v1492
    %v1710 = vpop.f32.mrf.mxu0
    %v1711 = vadd.f32 %v1522, %v1710
    %v1712 = vpop.f32.mrf.mxu0
    %v1713 = vadd.f32 %v1522, %v1712
    %1714 = vmatmul.bf16.gmra.mxu0 %v1493
    %v1715 = vpop.f32.mrf.mxu0
    %v1716 = vadd.f32 %v1522, %v1715
    %v1717 = vpop.f32.mrf.mxu0
    %v1718 = vadd.f32 %v1522, %v1717
    %1719 = vmatmul.bf16.gmra.mxu0 %v1494
    %v1720 = vpop.f32.mrf.mxu0
    %v1721 = vadd.f32 %v1522, %v1720
    %v1722 = vpop.f32.mrf.mxu0
    %v1723 = vadd.f32 %v1522, %v1722
    %1724 = vmatmul.bf16.gmra.mxu0 %v1495
    %v1725 = vpop.f32.mrf.mxu0
    %v1726 = vadd.f32 %v1522, %v1725
    %v1727 = vpop.f32.mrf.mxu0
    %v1728 = vadd.f32 %v1522, %v1727
    %1729 = vmatmul.bf16.gmra.mxu0 %v1496
    %v1730 = vpop.f32.mrf.mxu0
    %v1731 = vadd.f32 %v1522, %v1730
    %v1732 = vpop.f32.mrf.mxu0
    %v1733 = vadd.f32 %v1522, %v1732
    %1734 = vmatmul.bf16.gmra.mxu0 %v1497
    %v1735 = vpop.f32.mrf.mxu0
    %v1736 = vadd.f32 %v1522, %v1735
    %v1737 = vpop.f32.mrf.mxu0
    %v1738 = vadd.f32 %v1522, %v1737
    %1739 = vmatmul.bf16.gmra.mxu0 %v1498
    %v1740 = vpop.f32.mrf.mxu0
    %v1741 = vadd.f32 %v1522, %v1740
    %v1742 = vpop.f32.mrf.mxu0
    %v1743 = vadd.f32 %v1522, %v1742
    %1744 = vmatmul.bf16.gmra.mxu0 %v1499
    %v1745 = vpop.f32.mrf.mxu0
    %v1746 = vadd.f32 %v1522, %v1745
    %v1747 = vpop.f32.mrf.mxu0
    %v1748 = vadd.f32 %v1522, %v1747
    %1749 = vmatmul.bf16.gmra.mxu0 %v1500
    %v1750 = vpop.f32.mrf.mxu0
    %v1751 = vadd.f32 %v1522, %v1750
    %v1752 = vpop.f32.mrf.mxu0
    %v1753 = vadd.f32 %v1522, %v1752
    %1754 = vmatmul.bf16.gmra.mxu0 %v1501
    %v1755 = vpop.f32.mrf.mxu0
    %v1756 = vadd.f32 %v1522, %v1755
    %v1757 = vpop.f32.mrf.mxu0
    %v1758 = vadd.f32 %v1522, %v1757
    %1759 = vmatmul.bf16.gmra.mxu0 %v1502
    %v1760 = vpop.f32.mrf.mxu0
    %v1761 = vadd.f32 %v1522, %v1760
    %v1762 = vpop.f32.mrf.mxu0
    %v1763 = vadd.f32 %v1522, %v1762
    %1764 = vmatmul.bf16.gmra.mxu0 %v1503
    %v1765 = vpop.f32.mrf.mxu0
    %v1766 = vadd.f32 %v1522, %v1765
    %v1767 = vpop.f32.mrf.mxu0
    %v1768 = vadd.f32 %v1522, %v1767
    %1769 = vmatmul.bf16.gmra.mxu0 %v1504
    %v1770 = vpop.f32.mrf.mxu0
    %v1771 = vadd.f32 %v1522, %v1770
    %v1772 = vpop.f32.mrf.mxu0
    %v1773 = vadd.f32 %v1522, %v1772
    %1774 = vdwg.mxu0
    %1775 = vmatpush.bf16.msra.mxu0 %v1589
    %1776 = vmatpush.bf16.msra.mxu0 %v1587
    %1777 = vmatpush.bf16.msra.mxu0 %v1585
    %1778 = vmatpush.bf16.msra.mxu0 %v1583
    %1779 = vmatpush.bf16.msra.mxu0 %v1581
    %1780 = vmatpush.bf16.msra.mxu0 %v1579
    %1781 = vmatpush.bf16.msra.mxu0 %v1577
    %1782 = vmatpush.bf16.msra.mxu0 %v1575
    %1783 = vmatmul.bf16.gmra.mxu0 %v1473
    %v1784 = vpop.f32.mrf.mxu0
    %v1785 = vadd.f32 %v1523, %v1784
    %v1786 = vpop.f32.mrf.mxu0
    %v1787 = vadd.f32 %v1523, %v1786
    %1788 = vmatmul.bf16.gmra.mxu0 %v1474
    %v1789 = vpop.f32.mrf.mxu0
    %v1790 = vadd.f32 %v1523, %v1789
    %v1791 = vpop.f32.mrf.mxu0
    %v1792 = vadd.f32 %v1523, %v1791
    %1793 = vmatmul.bf16.gmra.mxu0 %v1475
    %v1794 = vpop.f32.mrf.mxu0
    %v1795 = vadd.f32 %v1523, %v1794
    %v1796 = vpop.f32.mrf.mxu0
    %v1797 = vadd.f32 %v1523, %v1796
    %1798 = vmatmul.bf16.gmra.mxu0 %v1476
    %v1799 = vpop.f32.mrf.mxu0
    %v1800 = vadd.f32 %v1523, %v1799
    %v1801 = vpop.f32.mrf.mxu0
    %v1802 = vadd.f32 %v1523, %v1801
    %1803 = vmatmul.bf16.gmra.mxu0 %v1477
    %v1804 = vpop.f32.mrf.mxu0
    %v1805 = vadd.f32 %v1523, %v1804
    %v1806 = vpop.f32.mrf.mxu0
    %v1807 = vadd.f32 %v1523, %v1806
    %1808 = vmatmul.bf16.gmra.mxu0 %v1478
    %v1809 = vpop.f32.mrf.mxu0
    %v1810 = vadd.f32 %v1523, %v1809
    %v1811 = vpop.f32.mrf.mxu0
    %v1812 = vadd.f32 %v1523, %v1811
    %1813 = vmatmul.bf16.gmra.mxu0 %v1479
    %v1814 = vpop.f32.mrf.mxu0
    %v1815 = vadd.f32 %v1523, %v1814
    %v1816 = vpop.f32.mrf.mxu0
    %v1817 = vadd.f32 %v1523, %v1816
    %1818 = vmatmul.bf16.gmra.mxu0 %v1480
    %v1819 = vpop.f32.mrf.mxu0
    %v1820 = vadd.f32 %v1523, %v1819
    %v1821 = vpop.f32.mrf.mxu0
    %v1822 = vadd.f32 %v1523, %v1821
    %1823 = vmatmul.bf16.gmra.mxu0 %v1481
    %v1824 = vpop.f32.mrf.mxu0
    %v1825 = vadd.f32 %v1523, %v1824
    %v1826 = vpop.f32.mrf.mxu0
    %v1827 = vadd.f32 %v1523, %v1826
    %1828 = vmatmul.bf16.gmra.mxu0 %v1482
    %v1829 = vpop.f32.mrf.mxu0
    %v1830 = vadd.f32 %v1523, %v1829
    %v1831 = vpop.f32.mrf.mxu0
    %v1832 = vadd.f32 %v1523, %v1831
    %1833 = vmatmul.bf16.gmra.mxu0 %v1483
    %v1834 = vpop.f32.mrf.mxu0
    %v1835 = vadd.f32 %v1523, %v1834
    %v1836 = vpop.f32.mrf.mxu0
    %v1837 = vadd.f32 %v1523, %v1836
    %1838 = vmatmul.bf16.gmra.mxu0 %v1484
    %v1839 = vpop.f32.mrf.mxu0
    %v1840 = vadd.f32 %v1523, %v1839
    %v1841 = vpop.f32.mrf.mxu0
    %v1842 = vadd.f32 %v1523, %v1841
    %1843 = vmatmul.bf16.gmra.mxu0 %v1485
    %v1844 = vpop.f32.mrf.mxu0
    %v1845 = vadd.f32 %v1523, %v1844
    %v1846 = vpop.f32.mrf.mxu0
    %v1847 = vadd.f32 %v1523, %v1846
    %1848 = vmatmul.bf16.gmra.mxu0 %v1486
    %v1849 = vpop.f32.mrf.mxu0
    %v1850 = vadd.f32 %v1523, %v1849
    %v1851 = vpop.f32.mrf.mxu0
    %v1852 = vadd.f32 %v1523, %v1851
    %1853 = vmatmul.bf16.gmra.mxu0 %v1487
    %v1854 = vpop.f32.mrf.mxu0
    %v1855 = vadd.f32 %v1523, %v1854
    %v1856 = vpop.f32.mrf.mxu0
    %v1857 = vadd.f32 %v1523, %v1856
    %1858 = vmatmul.bf16.gmra.mxu0 %v1488
    %v1859 = vpop.f32.mrf.mxu0
    %v1860 = vadd.f32 %v1523, %v1859
    %v1861 = vpop.f32.mrf.mxu0
    %v1862 = vadd.f32 %v1523, %v1861
    %1863 = vmatmul.bf16.gmra.mxu0 %v1489
    %v1864 = vpop.f32.mrf.mxu0
    %v1865 = vadd.f32 %v1523, %v1864
    %v1866 = vpop.f32.mrf.mxu0
    %v1867 = vadd.f32 %v1523, %v1866
    %1868 = vmatmul.bf16.gmra.mxu0 %v1490
    %v1869 = vpop.f32.mrf.mxu0
    %v1870 = vadd.f32 %v1523, %v1869
    %v1871 = vpop.f32.mrf.mxu0
    %v1872 = vadd.f32 %v1523, %v1871
    %1873 = vmatmul.bf16.gmra.mxu0 %v1491
    %v1874 = vpop.f32.mrf.mxu0
    %v1875 = vadd.f32 %v1523, %v1874
    %v1876 = vpop.f32.mrf.mxu0
    %v1877 = vadd.f32 %v1523, %v1876
    %1878 = vmatmul.bf16.gmra.mxu0 %v1492
    %v1879 = vpop.f32.mrf.mxu0
    %v1880 = vadd.f32 %v1523, %v1879
    %v1881 = vpop.f32.mrf.mxu0
    %v1882 = vadd.f32 %v1523, %v1881
    %1883 = vmatmul.bf16.gmra.mxu0 %v1493
    %v1884 = vpop.f32.mrf.mxu0
    %v1885 = vadd.f32 %v1523, %v1884
    %v1886 = vpop.f32.mrf.mxu0
    %v1887 = vadd.f32 %v1523, %v1886
    %1888 = vmatmul.bf16.gmra.mxu0 %v1494
    %v1889 = vpop.f32.mrf.mxu0
    %v1890 = vadd.f32 %v1523, %v1889
    %v1891 = vpop.f32.mrf.mxu0
    %v1892 = vadd.f32 %v1523, %v1891
    %1893 = vmatmul.bf16.gmra.mxu0 %v1495
    %v1894 = vpop.f32.mrf.mxu0
    %v1895 = vadd.f32 %v1523, %v1894
    %v1896 = vpop.f32.mrf.mxu0
    %v1897 = vadd.f32 %v1523, %v1896
    %1898 = vmatmul.bf16.gmra.mxu0 %v1496
    %v1899 = vpop.f32.mrf.mxu0
    %v1900 = vadd.f32 %v1523, %v1899
    %v1901 = vpop.f32.mrf.mxu0
    %v1902 = vadd.f32 %v1523, %v1901
    %1903 = vmatmul.bf16.gmra.mxu0 %v1497
    %v1904 = vpop.f32.mrf.mxu0
    %v1905 = vadd.f32 %v1523, %v1904
    %v1906 = vpop.f32.mrf.mxu0
    %v1907 = vadd.f32 %v1523, %v1906
    %1908 = vmatmul.bf16.gmra.mxu0 %v1498
    %v1909 = vpop.f32.mrf.mxu0
    %v1910 = vadd.f32 %v1523, %v1909
    %v1911 = vpop.f32.mrf.mxu0
    %v1912 = vadd.f32 %v1523, %v1911
    %1913 = vmatmul.bf16.gmra.mxu0 %v1499
    %v1914 = vpop.f32.mrf.mxu0
    %v1915 = vadd.f32 %v1523, %v1914
    %v1916 = vpop.f32.mrf.mxu0
    %v1917 = vadd.f32 %v1523, %v1916
    %1918 = vmatmul.bf16.gmra.mxu0 %v1500
    %v1919 = vpop.f32.mrf.mxu0
    %v1920 = vadd.f32 %v1523, %v1919
    %v1921 = vpop.f32.mrf.mxu0
    %v1922 = vadd.f32 %v1523, %v1921
    %1923 = vmatmul.bf16.gmra.mxu0 %v1501
    %v1924 = vpop.f32.mrf.mxu0
    %v1925 = vadd.f32 %v1523, %v1924
    %v1926 = vpop.f32.mrf.mxu0
    %v1927 = vadd.f32 %v1523, %v1926
    %1928 = vmatmul.bf16.gmra.mxu0 %v1502
    %v1929 = vpop.f32.mrf.mxu0
    %v1930 = vadd.f32 %v1523, %v1929
    %v1931 = vpop.f32.mrf.mxu0
    %v1932 = vadd.f32 %v1523, %v1931
    %1933 = vmatmul.bf16.gmra.mxu0 %v1503
    %v1934 = vpop.f32.mrf.mxu0
    %v1935 = vadd.f32 %v1523, %v1934
    %v1936 = vpop.f32.mrf.mxu0
    %v1937 = vadd.f32 %v1523, %v1936
    %1938 = vmatmul.bf16.gmra.mxu0 %v1504
    %v1939 = vpop.f32.mrf.mxu0
    %v1940 = vadd.f32 %v1523, %v1939
    %v1941 = vpop.f32.mrf.mxu0
    %v1942 = vadd.f32 %v1523, %v1941
    %1943 = vdwg.mxu0
    %v1944 = vpack.c.bf16 %v1785, %v1616
    %v1945 = vpack.c.bf16 %v1787, %v1618
    %v1946 = vpack.c.bf16 %v1790, %v1621
    %v1947 = vpack.c.bf16 %v1792, %v1623
    %v1948 = vpack.c.bf16 %v1795, %v1626
    %v1949 = vpack.c.bf16 %v1797, %v1628
    %v1950 = vpack.c.bf16 %v1800, %v1631
    %v1951 = vpack.c.bf16 %v1802, %v1633
    %v1952 = vpack.c.bf16 %v1805, %v1636
    %v1953 = vpack.c.bf16 %v1807, %v1638
    %v1954 = vpack.c.bf16 %v1810, %v1641
    %v1955 = vpack.c.bf16 %v1812, %v1643
    %v1956 = vpack.c.bf16 %v1815, %v1646
    %v1957 = vpack.c.bf16 %v1817, %v1648
    %v1958 = vpack.c.bf16 %v1820, %v1651
    %v1959 = vpack.c.bf16 %v1822, %v1653
    %v1960 = vpack.c.bf16 %v1825, %v1656
    %v1961 = vpack.c.bf16 %v1827, %v1658
    %v1962 = vpack.c.bf16 %v1830, %v1661
    %v1963 = vpack.c.bf16 %v1832, %v1663
    %v1964 = vpack.c.bf16 %v1835, %v1666
    %v1965 = vpack.c.bf16 %v1837, %v1668
    %v1966 = vpack.c.bf16 %v1840, %v1671
    %v1967 = vpack.c.bf16 %v1842, %v1673
    %v1968 = vpack.c.bf16 %v1845, %v1676
    %v1969 = vpack.c.bf16 %v1847, %v1678
    %v1970 = vpack.c.bf16 %v1850, %v1681
    %v1971 = vpack.c.bf16 %v1852, %v1683
    %v1972 = vpack.c.bf16 %v1855, %v1686
    %v1973 = vpack.c.bf16 %v1857, %v1688
    %v1974 = vpack.c.bf16 %v1860, %v1691
    %v1975 = vpack.c.bf16 %v1862, %v1693
    %v1976 = vpack.c.bf16 %v1865, %v1696
    %v1977 = vpack.c.bf16 %v1867, %v1698
    %v1978 = vpack.c.bf16 %v1870, %v1701
    %v1979 = vpack.c.bf16 %v1872, %v1703
    %v1980 = vpack.c.bf16 %v1875, %v1706
    %v1981 = vpack.c.bf16 %v1877, %v1708
    %v1982 = vpack.c.bf16 %v1880, %v1711
    %v1983 = vpack.c.bf16 %v1882, %v1713
    %v1984 = vpack.c.bf16 %v1885, %v1716
    %v1985 = vpack.c.bf16 %v1887, %v1718
    %v1986 = vpack.c.bf16 %v1890, %v1721
    %v1987 = vpack.c.bf16 %v1892, %v1723
    %v1988 = vpack.c.bf16 %v1895, %v1726
    %v1989 = vpack.c.bf16 %v1897, %v1728
    %v1990 = vpack.c.bf16 %v1900, %v1731
    %v1991 = vpack.c.bf16 %v1902, %v1733
    %v1992 = vpack.c.bf16 %v1905, %v1736
    %v1993 = vpack.c.bf16 %v1907, %v1738
    %v1994 = vpack.c.bf16 %v1910, %v1741
    %v1995 = vpack.c.bf16 %v1912, %v1743
    %v1996 = vpack.c.bf16 %v1915, %v1746
    %v1997 = vpack.c.bf16 %v1917, %v1748
    %v1998 = vpack.c.bf16 %v1920, %v1751
    %v1999 = vpack.c.bf16 %v1922, %v1753
    %v2000 = vpack.c.bf16 %v1925, %v1756
    %v2001 = vpack.c.bf16 %v1927, %v1758
    %v2002 = vpack.c.bf16 %v1930, %v1761
    %v2003 = vpack.c.bf16 %v1932, %v1763
    %v2004 = vpack.c.bf16 %v1935, %v1766
    %v2005 = vpack.c.bf16 %v1937, %v1768
    %v2006 = vpack.c.bf16 %v1940, %v1771
    %v2007 = vpack.c.bf16 %v1942, %v1773
    %2008 = vst [vmem:[#allocation10] sm:$0xff] %v1944
    %2009 = vst [vmem:[#allocation10 + $0x8] sm:$0xff] %v1945
    %2010 = vst [vmem:[#allocation10 + $0x10] sm:$0xff] %v1946
    %2011 = vst [vmem:[#allocation10 + $0x18] sm:$0xff] %v1947
    %2012 = vst [vmem:[#allocation10 + $0x20] sm:$0xff] %v1948
    %2013 = vst [vmem:[#allocation10 + $0x28] sm:$0xff] %v1949
    %2014 = vst [vmem:[#allocation10 + $0x30] sm:$0xff] %v1950
    %2015 = vst [vmem:[#allocation10 + $0x38] sm:$0xff] %v1951
    %2016 = vst [vmem:[#allocation10 + $0x40] sm:$0xff] %v1952
    %2017 = vst [vmem:[#allocation10 + $0x48] sm:$0xff] %v1953
    %2018 = vst [vmem:[#allocation10 + $0x50] sm:$0xff] %v1954
    %2019 = vst [vmem:[#allocation10 + $0x58] sm:$0xff] %v1955
    %2020 = vst [vmem:[#allocation10 + $0x60] sm:$0xff] %v1956
    %2021 = vst [vmem:[#allocation10 + $0x68] sm:$0xff] %v1957
    %2022 = vst [vmem:[#allocation10 + $0x70] sm:$0xff] %v1958
    %2023 = vst [vmem:[#allocation10 + $0x78] sm:$0xff] %v1959
    %2024 = vst [vmem:[#allocation10 + $0x80] sm:$0xff] %v1960
    %2025 = vst [vmem:[#allocation10 + $0x88] sm:$0xff] %v1961
    %2026 = vst [vmem:[#allocation10 + $0x90] sm:$0xff] %v1962
    %2027 = vst [vmem:[#allocation10 + $0x98] sm:$0xff] %v1963
    %2028 = vst [vmem:[#allocation10 + $0xa0] sm:$0xff] %v1964
    %2029 = vst [vmem:[#allocation10 + $0xa8] sm:$0xff] %v1965
    %2030 = vst [vmem:[#allocation10 + $0xb0] sm:$0xff] %v1966
    %2031 = vst [vmem:[#allocation10 + $0xb8] sm:$0xff] %v1967
    %2032 = vst [vmem:[#allocation10 + $0xc0] sm:$0xff] %v1968
    %2033 = vst [vmem:[#allocation10 + $0xc8] sm:$0xff] %v1969
    %2034 = vst [vmem:[#allocation10 + $0xd0] sm:$0xff] %v1970
    %2035 = vst [vmem:[#allocation10 + $0xd8] sm:$0xff] %v1971
    %2036 = vst [vmem:[#allocation10 + $0xe0] sm:$0xff] %v1972
    %2037 = vst [vmem:[#allocation10 + $0xe8] sm:$0xff] %v1973
    %2038 = vst [vmem:[#allocation10 + $0xf0] sm:$0xff] %v1974
    %2039 = vst [vmem:[#allocation10 + $0xf8] sm:$0xff] %v1975
    %2040 = vst [vmem:[#allocation10 + $0x100] sm:$0xff] %v1976
    %2041 = vst [vmem:[#allocation10 + $0x108] sm:$0xff] %v1977
    %2042 = vst [vmem:[#allocation10 + $0x110] sm:$0xff] %v1978
    %2043 = vst [vmem:[#allocation10 + $0x118] sm:$0xff] %v1979
    %2044 = vst [vmem:[#allocation10 + $0x120] sm:$0xff] %v1980
    %2045 = vst [vmem:[#allocation10 + $0x128] sm:$0xff] %v1981
    %2046 = vst [vmem:[#allocation10 + $0x130] sm:$0xff] %v1982
    %2047 = vst [vmem:[#allocation10 + $0x138] sm:$0xff] %v1983
    %2048 = vst [vmem:[#allocation10 + $0x140] sm:$0xff] %v1984
    %2049 = vst [vmem:[#allocation10 + $0x148] sm:$0xff] %v1985
    %2050 = vst [vmem:[#allocation10 + $0x150] sm:$0xff] %v1986
    %2051 = vst [vmem:[#allocation10 + $0x158] sm:$0xff] %v1987
    %2052 = vst [vmem:[#allocation10 + $0x160] sm:$0xff] %v1988
    %2053 = vst [vmem:[#allocation10 + $0x168] sm:$0xff] %v1989
    %2054 = vst [vmem:[#allocation10 + $0x170] sm:$0xff] %v1990
    %2055 = vst [vmem:[#allocation10 + $0x178] sm:$0xff] %v1991
    %2056 = vst [vmem:[#allocation10 + $0x180] sm:$0xff] %v1992
    %2057 = vst [vmem:[#allocation10 + $0x188] sm:$0xff] %v1993
    %2058 = vst [vmem:[#allocation10 + $0x190] sm:$0xff] %v1994
    %2059 = vst [vmem:[#allocation10 + $0x198] sm:$0xff] %v1995
    %2060 = vst [vmem:[#allocation10 + $0x1a0] sm:$0xff] %v1996
    %2061 = vst [vmem:[#allocation10 + $0x1a8] sm:$0xff] %v1997
    %2062 = vst [vmem:[#allocation10 + $0x1b0] sm:$0xff] %v1998
    %2063 = vst [vmem:[#allocation10 + $0x1b8] sm:$0xff] %v1999
    %2064 = vst [vmem:[#allocation10 + $0x1c0] sm:$0xff] %v2000
    %2065 = vst [vmem:[#allocation10 + $0x1c8] sm:$0xff] %v2001
    %2066 = vst [vmem:[#allocation10 + $0x1d0] sm:$0xff] %v2002
    %2067 = vst [vmem:[#allocation10 + $0x1d8] sm:$0xff] %v2003
    %2068 = vst [vmem:[#allocation10 + $0x1e0] sm:$0xff] %v2004
    %2069 = vst [vmem:[#allocation10 + $0x1e8] sm:$0xff] %v2005
    %2070 = vst [vmem:[#allocation10 + $0x1f0] sm:$0xff] %v2006
    %2071 = vst [vmem:[#allocation10 + $0x1f8] sm:$0xff] %v2007
    // Predicated region
    $region34: #{tpu_custom_call.1} parent=1 // pred_check
      _
    $region35: #{tpu_custom_call.1} parent=1 // pred_check_branch
      %2073 = sbr.rel (0) target = $region37
    $region36: #{tpu_custom_call.1} parent=1 // pred_region
      %2075 = vsyncadd [#allocation4], 0
      %s2076 = sshll.u32 [#allocation10], 4
      %s2077 = int_to_ptr.vmem [resolvable:$true] %s2076
      %s2078 = sshll.u32 %s4, 4
      %s2079 = int_to_ptr.hbm [resolvable:$true] %s2078
      %2084 = dma.vmem_to_hbm [thread:$0]  %s2077, 8192, %s2079, [#allocation4], 128, 128, 8
    $region37: #{tpu_custom_call.1} parent=1 // pred_fallthru
      _
    // Predicated region
    $region38: #{tpu_custom_call.1} parent=1 // pred_check
      _
    $region39: #{tpu_custom_call.1} parent=1 // pred_check_branch
      %2086 = sbr.rel (0) target = $region41
    $region40: #{tpu_custom_call.1} parent=1 // pred_region
      %2088 = vsyncadd [#allocation12], 0
      %s2089 = sshll.u32 [#allocation11], 4
      %s2090 = int_to_ptr.vmem [resolvable:$true] %s2089
      %s2091 = sshll.u32 %s5, 4
      %s2092 = int_to_ptr.hbm [resolvable:$true] %s2091
      %2097 = dma.vmem_to_hbm [thread:$0]  %s2090, 4096, %s2092, [#allocation12], 64, 64, 4
    $region41: #{tpu_custom_call.1} parent=1 // pred_fallthru
      _
    // Predicated region
    $region42: #{tpu_custom_call.1} parent=1 // pred_check
      _
    $region43: #{tpu_custom_call.1} parent=1 // pred_check_branch
      %2099 = sbr.rel (0) target = $region45
    $region44: #{tpu_custom_call.1} parent=1 // pred_region
      %2101 = dma.done [#allocation4], 8192
    $region45: #{tpu_custom_call.1} parent=1 // pred_fallthru
      _
    // Predicated region
    $region46: #{tpu_custom_call.1} parent=1 // pred_check
      _
    $region47: #{tpu_custom_call.1} parent=1 // pred_check_branch
      %2103 = sbr.rel (0) target = $region49
    $region48: #{tpu_custom_call.1} parent=1 // pred_region
      %2105 = dma.done [#allocation12], 4096
    $region49: #{tpu_custom_call.1} parent=1 // pred_fallthru
      _
    %2106 = vsyncpa [#allocation3], 1
    %2107 = vsyncpa [#allocation6], 1
    %2108 = vsyncpa [#allocation9], 1
    %2109 = vsyncpa [#allocation4], 1
    %2110 = vsyncpa [#allocation12], 1

</llo_original>
